<compile_context>
chip_gen: v7x
topology: tpu7x:2x2x1
jax: 0.10.0
libtpu: 0.0.40
codegen_flags: <defaults>
</compile_context>

<pallas_src>
import functools
import math

import jax
import jax.numpy as jnp
from jax.experimental import pallas as pl
from jax.experimental.pallas import tpu as pltpu


# ----------------------------- in-kernel helpers -----------------------------
def _gelu_tanh(x):
    c = math.sqrt(2.0 / math.pi)
    return 0.5 * x * (1.0 + jnp.tanh(c * (x + 0.044715 * x * x * x)))


def _dot_bf16(a, b):
    return jnp.dot(a.astype(jnp.bfloat16), b.astype(jnp.bfloat16),
                   preferred_element_type=jnp.float32)


# ------------------------------- fused kernel --------------------------------
def _fused_live_path_kernel(pr_ref, mol_ref,
                            wqkv_ref, bqkv_ref, wo_ref, bo_ref,
                            w1_ref, b1_ref, w2_ref, b2_ref,
                            o_ref, *, lq, e_dim, scale):
    """One batch element per grid step:
       x = [prompts ; mol]  (VMEM concat)
       attn = out_proj(softmax(Q[:lq] K^T * scale) V)    (single head)
       out  = MLP(MLP(attn)) + attn
    """
    E = e_dim
    xp = pr_ref[0].astype(jnp.float32)          # (Lp, E)
    xm = mol_ref[0].astype(jnp.float32)         # (Lm, E)
    x = jnp.concatenate([xp, xm], axis=0)       # (Ltot, E), VMEM-only concat

    # fused QKV projection: one lane-dense (E, 3E) matmul
    qkv = _dot_bf16(x, wqkv_ref[...]) + bqkv_ref[...]          # (Ltot, 3E) f32
    q = qkv[:lq, :E]                                           # only live rows
    k = qkv[:, E:2 * E]
    v = qkv[:, 2 * E:]

    # single-head scaled dot-product attention, softmax in f32
    s = jax.lax.dot_general(q.astype(jnp.bfloat16), k.astype(jnp.bfloat16),
                            (((1,), (1,)), ((), ())),
                            preferred_element_type=jnp.float32) * scale
    s = s - jnp.max(s, axis=-1, keepdims=True)
    p = jnp.exp(s)
    p = p * pl.reciprocal(jnp.sum(p, axis=-1, keepdims=True), approx=True)
    ctx = _dot_bf16(p, v)                                      # (Lq, E)
    attn = _dot_bf16(ctx, wo_ref[...]) + bo_ref[...]           # == all_feats[:Lq]

    def mlp_once(t):
        h = _dot_bf16(t, w1_ref[...]) + b1_ref[...]            # (Lq, 4E)
        h = _gelu_tanh(h)
        return _dot_bf16(h, w2_ref[...]) + b2_ref[...]         # (Lq, E)

    o_ref[0] = (mlp_once(mlp_once(attn)) + attn).astype(o_ref.dtype)


# ------------------------------- module forward ------------------------------
def multiview_qformer_layer_forward(params, queries, mol, prompts):
    """Inputs follow PyTorch batch_first=False layout: (seq, batch, embed).

    Only `queries.shape[0]` (a static Python int) influences the returned
    tensor; the sa_q / cross_a / ffn_mol / LayerNorm branches of the PyTorch
    forward are dead w.r.t. the return value and are intentionally not emitted.
    """
    Lq = queries.shape[0]
    Lm, N, E = mol.shape
    Lp = prompts.shape[0]
    assert Lq <= Lp + Lm, "split length must not exceed cat([prompts, mol]) length"
    scale = 1.0 / math.sqrt(E)                  # num_heads = 1 -> head_dim = E

    # one transpose to batch-first at entry, one back at exit
    pr_b = jnp.transpose(prompts, (1, 0, 2)).astype(jnp.float32)   # (N, Lp, E)
    mol_b = jnp.transpose(mol, (1, 0, 2)).astype(jnp.float32)      # (N, Lm, E)

    a = params["sa_a"]
    f = params["ffn_pro"]

    kernel = functools.partial(_fused_live_path_kernel,
                               lq=Lq, e_dim=E, scale=scale)

    out_b = pl.pallas_call(
        kernel,
        grid=(N,),
        in_specs=[
            pl.BlockSpec((1, Lp, E), lambda n: (n, 0, 0)),
            pl.BlockSpec((1, Lm, E), lambda n: (n, 0, 0)),
            pl.BlockSpec((E, 3 * E), lambda n: (0, 0)),   # wqkv (bf16, pre-T)
            pl.BlockSpec((1, 3 * E), lambda n: (0, 0)),   # bqkv
            pl.BlockSpec((E, E), lambda n: (0, 0)),       # wo   (bf16, pre-T)
            pl.BlockSpec((1, E), lambda n: (0, 0)),       # bo
            pl.BlockSpec((E, 4 * E), lambda n: (0, 0)),   # w1   (bf16, pre-T)
            pl.BlockSpec((1, 4 * E), lambda n: (0, 0)),   # b1
            pl.BlockSpec((4 * E, E), lambda n: (0, 0)),   # w2   (bf16, pre-T)
            pl.BlockSpec((1, E), lambda n: (0, 0)),       # b2
        ],
        out_specs=pl.BlockSpec((1, Lq, E), lambda n: (n, 0, 0)),
        out_shape=jax.ShapeDtypeStruct((N, Lq, E), jnp.float32),
        compiler_params=pltpu.CompilerParams(dimension_semantics=("parallel",)),
    )(pr_b, mol_b,
      a["wqkv"], a["bqkv"], a["wo"], a["bo"],
      f["w1"], f["b1"], f["w2"], f["b2"])

    return jnp.transpose(out_b, (1, 0, 2))      # back to (Lq, N, E)


# ----------------------------- parameter handling -----------------------------
def init_pt_params(key, E, scale=0.02):
    """Synthetic parameters in PyTorch layout: Linear weight (out, in), bias (out,).
    All module sub-layers are created for fidelity; only sa_a / ffn_pro feed
    the returned `prompts`."""
    def lin(k, out_d, in_d):
        kw, kb = jax.random.split(k)
        return (jax.random.normal(kw, (out_d, in_d), jnp.float32) * scale,
                jax.random.normal(kb, (out_d,), jnp.float32) * scale)

    def mha(k):
        k1, k2 = jax.random.split(k)
        in_w, in_b = lin(k1, 3 * E, E)
        out_w, out_b = lin(k2, E, E)
        return {"in_proj_weight": in_w, "in_proj_bias": in_b,
                "out_proj_weight": out_w, "out_proj_bias": out_b}

    def mlp(k):
        k1, k2 = jax.random.split(k)
        w1, b1 = lin(k1, 4 * E, E)
        w2, b2 = lin(k2, E, 4 * E)
        return {"fc1_w": w1, "fc1_b": b1, "fc2_w": w2, "fc2_b": b2}

    def ln():
        return {"g": jnp.ones((E,), jnp.float32), "b": jnp.zeros((E,), jnp.float32)}

    ks = jax.random.split(key, 5)
    return {
        "ln_q": ln(), "ln_q2": ln(), "ln_mol": ln(), "ln_q3": ln(), "ln_p": ln(),
        "sa_q": mha(ks[0]), "cross_a": mha(ks[1]), "sa_a": mha(ks[2]),
        "ffn_mol": mlp(ks[3]), "ffn_pro": mlp(ks[4]),
    }


def prepare_params(pt):
    """One-time preprocessing of the LIVE parameters: transpose (out,in)->(in,out),
    cast matmul weights to bf16, reshape biases to (1, dim) f32."""
    def mha(m):
        return {"wqkv": m["in_proj_weight"].T.astype(jnp.bfloat16),
                "bqkv": m["in_proj_bias"].reshape(1, -1).astype(jnp.float32),
                "wo": m["out_proj_weight"].T.astype(jnp.bfloat16),
                "bo": m["out_proj_bias"].reshape(1, -1).astype(jnp.float32)}

    def mlp(m):
        return {"w1": m["fc1_w"].T.astype(jnp.bfloat16),
                "b1": m["fc1_b"].reshape(1, -1).astype(jnp.float32),
                "w2": m["fc2_w"].T.astype(jnp.bfloat16),
                "b2": m["fc2_b"].reshape(1, -1).astype(jnp.float32)}

    return {"sa_a": mha(pt["sa_a"]), "ffn_pro": mlp(pt["ffn_pro"])}


# --------------------------- pure-JAX reference (f32) --------------------------
def _reference_forward(pt, queries, mol, prompts):
    E = queries.shape[-1]
    lq = queries.shape[0]
    x = jnp.concatenate([prompts, mol], axis=0)              # (Ltot, N, E)
    xb = jnp.transpose(x, (1, 0, 2))                         # (N, Ltot, E)
    m = pt["sa_a"]
    qkv = xb @ m["in_proj_weight"].T + m["in_proj_bias"]
    q, k, v = qkv[..., :E], qkv[..., E:2 * E], qkv[..., 2 * E:]
    s = jnp.einsum("nqe,nke->nqk", q, k) / jnp.sqrt(E)
    p = jax.nn.softmax(s, axis=-1)
    ctx = jnp.einsum("nqk,nke->nqe", p, v)
    attn = ctx @ m["out_proj_weight"].T + m["out_proj_bias"]
    pr = attn[:, :lq]

    def mlp_once(t, w):
        h = t @ w["fc1_w"].T + w["fc1_b"]
        h = jax.nn.gelu(h, approximate=True)
        return h @ w["fc2_w"].T + w["fc2_b"]

    pr_out = mlp_once(mlp_once(pr, pt["ffn_pro"]), pt["ffn_pro"]) + pr
    return jnp.transpose(pr_out, (1, 0, 2))


# ------------------------------------ main -------------------------------------
if __name__ == "__main__":
    E = 128     # embed_dim (module default 512) -- kept 128-lane aligned for the test
    N = 2       # batch
    LQ = 8      # queries sequence length (only its value feeds the output)
    LM = 8      # mol sequence length
    LP = 8      # prompts sequence length

    key = jax.random.PRNGKey(0)
    k_par, k_q, k_m, k_p = jax.random.split(key, 4)

    pt_params = init_pt_params(k_par, E)
    params = prepare_params(pt_params)

    queries = jax.random.normal(k_q, (LQ, N, E), jnp.float32)   # (seq, batch, embed)
    mol = jax.random.normal(k_m, (LM, N, E), jnp.float32)
    prompts = jax.random.normal(k_p, (LP, N, E), jnp.float32)

    fwd = jax.jit(multiview_qformer_layer_forward)
    out = fwd(params, queries, mol, prompts)
    out = jax.block_until_ready(out)

    assert out.shape == (LQ, N, E) and out.dtype == jnp.float32
    assert bool(jnp.all(jnp.isfinite(out)))

    # loose tolerance: kernel uses bf16 MXU inputs + approx reciprocal
    ref = _reference_forward(pt_params, queries, mol, prompts)
    assert bool(jnp.max(jnp.abs(out - ref)) < 5e-2)

    print("KERNEL_OK")
</pallas_src>

<mosaic_0001>
module attributes {stable_mosaic.version = 11 : i64} {
  func.func @_fused_live_path_kernel(%arg0: i32, %arg1: memref<1x8x128xf32, #tpu.memory_space<vmem>>, %arg2: memref<1x8x128xf32, #tpu.memory_space<vmem>>, %arg3: memref<128x384xbf16, #tpu.memory_space<vmem>>, %arg4: memref<1x384xf32, #tpu.memory_space<vmem>>, %arg5: memref<128x128xbf16, #tpu.memory_space<vmem>>, %arg6: memref<1x128xf32, #tpu.memory_space<vmem>>, %arg7: memref<128x512xbf16, #tpu.memory_space<vmem>>, %arg8: memref<1x512xf32, #tpu.memory_space<vmem>>, %arg9: memref<512x128xbf16, #tpu.memory_space<vmem>>, %arg10: memref<1x128xf32, #tpu.memory_space<vmem>>, %arg11: memref<1x8x128xf32, #tpu.memory_space<vmem>>) attributes {dimension_semantics = [#tpu.dimension_semantics<parallel>], iteration_bounds = array<i64: 2>, scalar_prefetch = 0 : i64, scratch_operands = 0 : i64, tpu.core_type = #tpu.core_type<tc>, window_params = [{transform_indices = @transform_0, window_bounds = array<i64: 1, 8, 128>}, {transform_indices = @transform_1, window_bounds = array<i64: 1, 8, 128>}, {pipeline_mode = #tpu.pipeline_mode<synchronous>, transform_indices = @transform_2, window_bounds = array<i64: 128, 384>}, {pipeline_mode = #tpu.pipeline_mode<synchronous>, transform_indices = @transform_3, window_bounds = array<i64: 1, 384>}, {pipeline_mode = #tpu.pipeline_mode<synchronous>, transform_indices = @transform_4, window_bounds = array<i64: 128, 128>}, {pipeline_mode = #tpu.pipeline_mode<synchronous>, transform_indices = @transform_5, window_bounds = array<i64: 1, 128>}, {pipeline_mode = #tpu.pipeline_mode<synchronous>, transform_indices = @transform_6, window_bounds = array<i64: 128, 512>}, {pipeline_mode = #tpu.pipeline_mode<synchronous>, transform_indices = @transform_7, window_bounds = array<i64: 1, 512>}, {pipeline_mode = #tpu.pipeline_mode<synchronous>, transform_indices = @transform_8, window_bounds = array<i64: 512, 128>}, {pipeline_mode = #tpu.pipeline_mode<synchronous>, transform_indices = @transform_9, window_bounds = array<i64: 1, 128>}, {transform_indices = @transform_10, window_bounds = array<i64: 1, 8, 128>}]} {
    %c0 = arith.constant 0 : index
    %c0_0 = arith.constant 0 : index
    %c0_1 = arith.constant 0 : index
    %0 = vector.load %arg1[%c0, %c0_0, %c0_1] : memref<1x8x128xf32, #tpu.memory_space<vmem>>, vector<1x8x128xf32>
    %1 = vector.shape_cast %0 : vector<1x8x128xf32> to vector<8x128xf32>
    %c0_2 = arith.constant 0 : index
    %c0_3 = arith.constant 0 : index
    %c0_4 = arith.constant 0 : index
    %2 = vector.load %arg2[%c0_2, %c0_3, %c0_4] : memref<1x8x128xf32, #tpu.memory_space<vmem>>, vector<1x8x128xf32>
    %3 = vector.shape_cast %2 : vector<1x8x128xf32> to vector<8x128xf32>
    %4 = tpu.concatenate %1, %3 in 0 : vector<8x128xf32>, vector<8x128xf32> -> vector<16x128xf32>
    %c0_5 = arith.constant 0 : index
    %c0_6 = arith.constant 0 : index
    %5 = vector.load %arg3[%c0_5, %c0_6] : memref<128x384xbf16, #tpu.memory_space<vmem>>, vector<128x384xbf16>
    %6 = arith.truncf %4 : vector<16x128xf32> to vector<16x128xbf16>
    %cst = arith.constant dense<0.000000e+00> : vector<16x384xf32>
    %7 = tpu.matmul %6, %5, %cst {dimension_numbers = #tpu.dot_dimension_numbers<[1], [0], [0], [1], [0, 0, 1, 1], [], []>} : vector<16x128xbf16>, vector<128x384xbf16>, vector<16x384xf32> -> vector<16x384xf32>
    %c0_7 = arith.constant 0 : index
    %c0_8 = arith.constant 0 : index
    %8 = vector.load %arg4[%c0_7, %c0_8] : memref<1x384xf32, #tpu.memory_space<vmem>>, vector<1x384xf32>
    %9 = vector.broadcast %8 : vector<1x384xf32> to vector<16x384xf32>
    %10 = arith.addf %7, %9 : vector<16x384xf32>
    %11 = vector.extract_strided_slice %10 {offsets = [0, 0], sizes = [8, 128], strides = [1, 1]} : vector<16x384xf32> to vector<8x128xf32>
    %12 = vector.extract_strided_slice %10 {offsets = [0, 128], sizes = [16, 128], strides = [1, 1]} : vector<16x384xf32> to vector<16x128xf32>
    %13 = vector.extract_strided_slice %10 {offsets = [0, 256], sizes = [16, 128], strides = [1, 1]} : vector<16x384xf32> to vector<16x128xf32>
    %14 = arith.truncf %11 : vector<8x128xf32> to vector<8x128xbf16>
    %15 = arith.truncf %12 : vector<16x128xf32> to vector<16x128xbf16>
    %cst_9 = arith.constant dense<0.000000e+00> : vector<8x16xf32>
    %16 = tpu.matmul %14, %15, %cst_9 {dimension_numbers = #tpu.dot_dimension_numbers<[1], [1], [0], [0], [0, 0, 1, 0], [], []>} : vector<8x128xbf16>, vector<16x128xbf16>, vector<8x16xf32> -> vector<8x16xf32>
    %cst_10 = arith.constant 0.0883883461 : f32
    %17 = vector.broadcast %cst_10 : f32 to vector<8x16xf32>
    %18 = arith.mulf %16, %17 : vector<8x16xf32>
    %cst_11 = arith.constant dense<0xFF800000> : vector<8xf32>
    %19 = vector.multi_reduction <maximumf>, %18, %cst_11 [1] : vector<8x16xf32> to vector<8xf32>
    %20 = vector.shape_cast %19 : vector<8xf32> to vector<8x1xf32>
    %21 = vector.broadcast %20 : vector<8x1xf32> to vector<8x16xf32>
    %22 = arith.subf %18, %21 : vector<8x16xf32>
    %23 = math.exp %22 : vector<8x16xf32>
    %cst_12 = arith.constant dense<0.000000e+00> : vector<8xf32>
    %24 = vector.multi_reduction <add>, %23, %cst_12 [1] : vector<8x16xf32> to vector<8xf32>
    %25 = vector.shape_cast %24 : vector<8xf32> to vector<8x1xf32>
    %26 = tpu.reciprocal %25 {approx = true} : vector<8x1xf32> -> vector<8x1xf32>
    %27 = vector.broadcast %26 : vector<8x1xf32> to vector<8x16xf32>
    %28 = arith.mulf %23, %27 : vector<8x16xf32>
    %29 = arith.truncf %28 : vector<8x16xf32> to vector<8x16xbf16>
    %30 = arith.truncf %13 : vector<16x128xf32> to vector<16x128xbf16>
    %cst_13 = arith.constant dense<0.000000e+00> : vector<8x128xf32>
    %31 = tpu.matmul %29, %30, %cst_13 {dimension_numbers = #tpu.dot_dimension_numbers<[1], [0], [0], [1], [0, 0, 1, 1], [], []>} : vector<8x16xbf16>, vector<16x128xbf16>, vector<8x128xf32> -> vector<8x128xf32>
    %c0_14 = arith.constant 0 : index
    %c0_15 = arith.constant 0 : index
    %32 = vector.load %arg5[%c0_14, %c0_15] : memref<128x128xbf16, #tpu.memory_space<vmem>>, vector<128x128xbf16>
    %33 = arith.truncf %31 : vector<8x128xf32> to vector<8x128xbf16>
    %cst_16 = arith.constant dense<0.000000e+00> : vector<8x128xf32>
    %34 = tpu.matmul %33, %32, %cst_16 {dimension_numbers = #tpu.dot_dimension_numbers<[1], [0], [0], [1], [0, 0, 1, 1], [], []>} : vector<8x128xbf16>, vector<128x128xbf16>, vector<8x128xf32> -> vector<8x128xf32>
    %c0_17 = arith.constant 0 : index
    %c0_18 = arith.constant 0 : index
    %35 = vector.load %arg6[%c0_17, %c0_18] : memref<1x128xf32, #tpu.memory_space<vmem>>, vector<1x128xf32>
    %36 = vector.broadcast %35 : vector<1x128xf32> to vector<8x128xf32>
    %37 = arith.addf %34, %36 : vector<8x128xf32>
    %c0_19 = arith.constant 0 : index
    %c0_20 = arith.constant 0 : index
    %38 = vector.load %arg7[%c0_19, %c0_20] : memref<128x512xbf16, #tpu.memory_space<vmem>>, vector<128x512xbf16>
    %39 = arith.truncf %37 : vector<8x128xf32> to vector<8x128xbf16>
    %cst_21 = arith.constant dense<0.000000e+00> : vector<8x512xf32>
    %40 = tpu.matmul %39, %38, %cst_21 {dimension_numbers = #tpu.dot_dimension_numbers<[1], [0], [0], [1], [0, 0, 1, 1], [], []>} : vector<8x128xbf16>, vector<128x512xbf16>, vector<8x512xf32> -> vector<8x512xf32>
    %c0_22 = arith.constant 0 : index
    %c0_23 = arith.constant 0 : index
    %41 = vector.load %arg8[%c0_22, %c0_23] : memref<1x512xf32, #tpu.memory_space<vmem>>, vector<1x512xf32>
    %42 = vector.broadcast %41 : vector<1x512xf32> to vector<8x512xf32>
    %43 = arith.addf %40, %42 : vector<8x512xf32>
    %cst_24 = arith.constant 5.000000e-01 : f32
    %44 = vector.broadcast %cst_24 : f32 to vector<8x512xf32>
    %45 = arith.mulf %44, %43 : vector<8x512xf32>
    %cst_25 = arith.constant 4.471500e-02 : f32
    %46 = vector.broadcast %cst_25 : f32 to vector<8x512xf32>
    %47 = arith.mulf %46, %43 : vector<8x512xf32>
    %48 = arith.mulf %47, %43 : vector<8x512xf32>
    %49 = arith.mulf %48, %43 : vector<8x512xf32>
    %50 = arith.addf %43, %49 : vector<8x512xf32>
    %cst_26 = arith.constant 0.797884583 : f32
    %51 = vector.broadcast %cst_26 : f32 to vector<8x512xf32>
    %52 = arith.mulf %51, %50 : vector<8x512xf32>
    %53 = math.tanh %52 : vector<8x512xf32>
    %cst_27 = arith.constant 1.000000e+00 : f32
    %54 = vector.broadcast %cst_27 : f32 to vector<8x512xf32>
    %55 = arith.addf %54, %53 : vector<8x512xf32>
    %56 = arith.mulf %45, %55 : vector<8x512xf32>
    %c0_28 = arith.constant 0 : index
    %c0_29 = arith.constant 0 : index
    %57 = vector.load %arg9[%c0_28, %c0_29] : memref<512x128xbf16, #tpu.memory_space<vmem>>, vector<512x128xbf16>
    %58 = arith.truncf %56 : vector<8x512xf32> to vector<8x512xbf16>
    %cst_30 = arith.constant dense<0.000000e+00> : vector<8x128xf32>
    %59 = tpu.matmul %58, %57, %cst_30 {dimension_numbers = #tpu.dot_dimension_numbers<[1], [0], [0], [1], [0, 0, 1, 1], [], []>} : vector<8x512xbf16>, vector<512x128xbf16>, vector<8x128xf32> -> vector<8x128xf32>
    %c0_31 = arith.constant 0 : index
    %c0_32 = arith.constant 0 : index
    %60 = vector.load %arg10[%c0_31, %c0_32] : memref<1x128xf32, #tpu.memory_space<vmem>>, vector<1x128xf32>
    %61 = vector.broadcast %60 : vector<1x128xf32> to vector<8x128xf32>
    %62 = arith.addf %59, %61 : vector<8x128xf32>
    %c0_33 = arith.constant 0 : index
    %c0_34 = arith.constant 0 : index
    %63 = vector.load %arg7[%c0_33, %c0_34] : memref<128x512xbf16, #tpu.memory_space<vmem>>, vector<128x512xbf16>
    %64 = arith.truncf %62 : vector<8x128xf32> to vector<8x128xbf16>
    %cst_35 = arith.constant dense<0.000000e+00> : vector<8x512xf32>
    %65 = tpu.matmul %64, %63, %cst_35 {dimension_numbers = #tpu.dot_dimension_numbers<[1], [0], [0], [1], [0, 0, 1, 1], [], []>} : vector<8x128xbf16>, vector<128x512xbf16>, vector<8x512xf32> -> vector<8x512xf32>
    %c0_36 = arith.constant 0 : index
    %c0_37 = arith.constant 0 : index
    %66 = vector.load %arg8[%c0_36, %c0_37] : memref<1x512xf32, #tpu.memory_space<vmem>>, vector<1x512xf32>
    %67 = vector.broadcast %66 : vector<1x512xf32> to vector<8x512xf32>
    %68 = arith.addf %65, %67 : vector<8x512xf32>
    %cst_38 = arith.constant 5.000000e-01 : f32
    %69 = vector.broadcast %cst_38 : f32 to vector<8x512xf32>
    %70 = arith.mulf %69, %68 : vector<8x512xf32>
    %cst_39 = arith.constant 4.471500e-02 : f32
    %71 = vector.broadcast %cst_39 : f32 to vector<8x512xf32>
    %72 = arith.mulf %71, %68 : vector<8x512xf32>
    %73 = arith.mulf %72, %68 : vector<8x512xf32>
    %74 = arith.mulf %73, %68 : vector<8x512xf32>
    %75 = arith.addf %68, %74 : vector<8x512xf32>
    %cst_40 = arith.constant 0.797884583 : f32
    %76 = vector.broadcast %cst_40 : f32 to vector<8x512xf32>
    %77 = arith.mulf %76, %75 : vector<8x512xf32>
    %78 = math.tanh %77 : vector<8x512xf32>
    %cst_41 = arith.constant 1.000000e+00 : f32
    %79 = vector.broadcast %cst_41 : f32 to vector<8x512xf32>
    %80 = arith.addf %79, %78 : vector<8x512xf32>
    %81 = arith.mulf %70, %80 : vector<8x512xf32>
    %c0_42 = arith.constant 0 : index
    %c0_43 = arith.constant 0 : index
    %82 = vector.load %arg9[%c0_42, %c0_43] : memref<512x128xbf16, #tpu.memory_space<vmem>>, vector<512x128xbf16>
    %83 = arith.truncf %81 : vector<8x512xf32> to vector<8x512xbf16>
    %cst_44 = arith.constant dense<0.000000e+00> : vector<8x128xf32>
    %84 = tpu.matmul %83, %82, %cst_44 {dimension_numbers = #tpu.dot_dimension_numbers<[1], [0], [0], [1], [0, 0, 1, 1], [], []>} : vector<8x512xbf16>, vector<512x128xbf16>, vector<8x128xf32> -> vector<8x128xf32>
    %c0_45 = arith.constant 0 : index
    %c0_46 = arith.constant 0 : index
    %85 = vector.load %arg10[%c0_45, %c0_46] : memref<1x128xf32, #tpu.memory_space<vmem>>, vector<1x128xf32>
    %86 = vector.broadcast %85 : vector<1x128xf32> to vector<8x128xf32>
    %87 = arith.addf %84, %86 : vector<8x128xf32>
    %88 = arith.addf %87, %37 : vector<8x128xf32>
    %c0_47 = arith.constant 0 : index
    %c0_48 = arith.constant 0 : index
    %c0_49 = arith.constant 0 : index
    %89 = vector.load %arg11[%c0_47, %c0_48, %c0_49] : memref<1x8x128xf32, #tpu.memory_space<vmem>>, vector<1x8x128xf32>
    %90 = vector.shape_cast %89 : vector<1x8x128xf32> to vector<8x128xf32>
    %91 = vector.shape_cast %88 : vector<8x128xf32> to vector<1x8x128xf32>
    tpu.vector_store %arg11[%c0_47, %c0_48, %c0_49], %91 {strides = array<i32>} : memref<1x8x128xf32, #tpu.memory_space<vmem>>, vector<1x8x128xf32>,
    return
  }
  func.func @transform_0(%arg0: i32) -> (i32, i32, i32) {
    %c0_i32 = arith.constant 0 : i32
    %c0_i32_0 = arith.constant 0 : i32
    %c0_i32_1 = arith.constant 0 : i32
    return %arg0, %c0_i32, %c0_i32_0 : i32, i32, i32
  }
  func.func @transform_1(%arg0: i32) -> (i32, i32, i32) {
    %c0_i32 = arith.constant 0 : i32
    %c0_i32_0 = arith.constant 0 : i32
    %c0_i32_1 = arith.constant 0 : i32
    return %arg0, %c0_i32, %c0_i32_0 : i32, i32, i32
  }
  func.func @transform_2(%arg0: i32) -> (i32, i32) {
    %c0_i32 = arith.constant 0 : i32
    %c0_i32_0 = arith.constant 0 : i32
    %c0_i32_1 = arith.constant 0 : i32
    return %c0_i32, %c0_i32_0 : i32, i32
  }
  func.func @transform_3(%arg0: i32) -> (i32, i32) {
    %c0_i32 = arith.constant 0 : i32
    %c0_i32_0 = arith.constant 0 : i32
    %c0_i32_1 = arith.constant 0 : i32
    return %c0_i32, %c0_i32_0 : i32, i32
  }
  func.func @transform_4(%arg0: i32) -> (i32, i32) {
    %c0_i32 = arith.constant 0 : i32
    %c0_i32_0 = arith.constant 0 : i32
    %c0_i32_1 = arith.constant 0 : i32
    return %c0_i32, %c0_i32_0 : i32, i32
  }
  func.func @transform_5(%arg0: i32) -> (i32, i32) {
    %c0_i32 = arith.constant 0 : i32
    %c0_i32_0 = arith.constant 0 : i32
    %c0_i32_1 = arith.constant 0 : i32
    return %c0_i32, %c0_i32_0 : i32, i32
  }
  func.func @transform_6(%arg0: i32) -> (i32, i32) {
    %c0_i32 = arith.constant 0 : i32
    %c0_i32_0 = arith.constant 0 : i32
    %c0_i32_1 = arith.constant 0 : i32
    return %c0_i32, %c0_i32_0 : i32, i32
  }
  func.func @transform_7(%arg0: i32) -> (i32, i32) {
    %c0_i32 = arith.constant 0 : i32
    %c0_i32_0 = arith.constant 0 : i32
    %c0_i32_1 = arith.constant 0 : i32
    return %c0_i32, %c0_i32_0 : i32, i32
  }
  func.func @transform_8(%arg0: i32) -> (i32, i32) {
    %c0_i32 = arith.constant 0 : i32
    %c0_i32_0 = arith.constant 0 : i32
    %c0_i32_1 = arith.constant 0 : i32
    return %c0_i32, %c0_i32_0 : i32, i32
  }
  func.func @transform_9(%arg0: i32) -> (i32, i32) {
    %c0_i32 = arith.constant 0 : i32
    %c0_i32_0 = arith.constant 0 : i32
    %c0_i32_1 = arith.constant 0 : i32
    return %c0_i32, %c0_i32_0 : i32, i32
  }
  func.func @transform_10(%arg0: i32) -> (i32, i32, i32) {
    %c0_i32 = arith.constant 0 : i32
    %c0_i32_0 = arith.constant 0 : i32
    %c0_i32_1 = arith.constant 0 : i32
    return %arg0, %c0_i32, %c0_i32_0 : i32, i32, i32
  }
}

</mosaic_0001>

<llo_original>
// kernel: multiview_qformer_layer_forward.1
$region0: #{multiview_qformer_layer_forward.1}
  #allocation0 [shape = 'u32[]', space=smem, size = 0x4, offset = 0x4, fixed_abs, tag = 'smem constant byte address 0x4 - core index']
  #allocation1 [shape = 'u32[144,128]{1,0:T(1,128)}', space=vmem, size = 0x12000, scoped, tag = 'internal scratch']
  %s0 = inlined_call_operand.vmem [shape: f32[2,8,128], index: 0, kind: input, shape index: {}]
  %s1 = inlined_call_operand.vmem [shape: f32[2,8,128], index: 1, kind: input, shape index: {}]
  %s2 = inlined_call_operand.hbm [shape: bf16[128,384], index: 2, kind: input, shape index: {}]
  %s3 = inlined_call_operand.vmem [shape: f32[1,384], index: 3, kind: input, shape index: {}]
  %s4 = inlined_call_operand.vmem [shape: bf16[128,128], index: 4, kind: input, shape index: {}]
  %s5 = inlined_call_operand.vmem [shape: f32[1,128], index: 5, kind: input, shape index: {}]
  %s6 = inlined_call_operand.hbm [shape: bf16[128,512], index: 6, kind: input, shape index: {}]
  %s7 = inlined_call_operand.vmem [shape: f32[1,512], index: 7, kind: input, shape index: {}]
  %s8 = inlined_call_operand.hbm [shape: bf16[512,128], index: 8, kind: input, shape index: {}]
  %s9 = inlined_call_operand.vmem [shape: f32[1,128], index: 9, kind: input, shape index: {}]
  %s10 = inlined_call_operand.vmem [shape: f32[2,8,128], index: 10, kind: output, shape index: {}]
  %s11 = sld [smem:[#allocation0]]
  $region85: #{multiview_qformer_layer_forward.1} parent=0
    _
  %s13 = ssub.s32 1, %s11
  %s14 = scalar_select 0, %s13, %s11
  $region1: #{multiview_qformer_layer_forward.1} parent=0
    #allocation2 [shape = 'u8[98304]{0}', space=vmem, size = 0x18000, scoped, tag = 'input window, operand 2, single buffered']
    #allocation3 [shape = 's32[2]{0}', space=sflag, size = 0x8, scoped, tag = 'scoped memory for multiview_qformer_layer_forward.1']
    #allocation4 [shape = 'u8[131072]{0}', space=vmem, size = 0x20000, scoped, tag = 'input window, operand 6, single buffered']
    #allocation5 [shape = 's32[1]{0}', space=sflag, size = 0x4, scoped, tag = 'scoped memory for multiview_qformer_layer_forward.1']
    #allocation6 [shape = 'u8[131072]{0}', space=vmem, size = 0x20000, scoped, tag = 'input window, operand 8, single buffered']
    %15 = vsyncpa [#allocation3], 0
    %16 = vsyncpa [#allocation5], 0
    loop: start=0, step=1, limit=4
    $region2: #{multiview_qformer_layer_forward.1} parent=1 // loop_pre_header
      _
    $region3: #{multiview_qformer_layer_forward.1} parent=1 // loop_header
      %s18 = sphi 0, %s22
      %p19 = scmp.ge.s32.totalorder %s18, 4
      %s28 = sphi 0, %s30
      %s31 = sphi 0, %s28
      %s32 = sphi 0, %s31
      %s48 = sphi 0, %s32
      %s54 = sphi 0, %s56
      %s57 = sphi 0, %s54
      %s58 = sphi 0, %s57
      %s74 = sphi 0, %s58
      %s78 = sphi 0, %s78
      %s80 = sphi 0, %s78
      %s81 = sphi 0, %s80
      %s95 = sphi 0, %s81
      %s99 = sphi 0, %s99
      %s101 = sphi 0, %s99
      %s102 = sphi 0, %s101
      %s116 = sphi 0, %s102
      %s120 = sphi 0, %s120
      %s122 = sphi 0, %s120
      %s123 = sphi 0, %s122
      %s137 = sphi 0, %s123
      %s141 = sphi 0, %s141
      %s143 = sphi 0, %s141
      %s144 = sphi 0, %s143
      %s158 = sphi 0, %s144
      %s162 = sphi 0, %s162
      %s164 = sphi 0, %s162
      %s165 = sphi 0, %s164
      %s179 = sphi 0, %s165
      %s183 = sphi 0, %s183
      %s185 = sphi 0, %s183
      %s186 = sphi 0, %s185
      %s200 = sphi 0, %s186
      %s204 = sphi 0, %s204
      %s206 = sphi 0, %s204
      %s207 = sphi 0, %s206
      %s221 = sphi 0, %s207
      %s225 = sphi 0, %s225
      %s227 = sphi 0, %s225
      %s228 = sphi 0, %s227
      %s242 = sphi 0, %s228
      %s248 = sphi 0, %s250
      %s251 = sphi 0, %s248
      %s252 = sphi 0, %s251
      %s268 = sphi 0, %s252
    $region4: #{multiview_qformer_layer_forward.1} parent=1 // loop_header_branch
      %21 = sbr.rel (%p19) target = $region8
    $region5: #{multiview_qformer_layer_forward.1} parent=1 // loop_body
      %s23 = ssub.s32 %s18, 1
      %s24 = ssub.s32 %s18, 2
      %s25 = sadd.s32 %s18, 1
      %s26 = ssub.s32 %s18, %s25
      %p27 = scmp.eq.s32.totalorder %s26, 0
      %s29 = sadd.s32 %s28, 1
      %s30 = scalar_select %p27, %s28, %s29
      %p33 = pneg %p27
      %p34 = scmp.eq.s32.totalorder %s18, 1
      %p35 = por %p33, %p34
      %p36 = scmp.ne.s32.totalorder %s28, %s31
      %p37 = scmp.eq.s32.totalorder %s18, 0
      %p38 = por %p36, %p37
      %p39 = scmp.ne.s32.totalorder %s28, %s31
      %p40 = scmp.eq.s32.totalorder %s23, 1
      %p41 = por %p39, %p40
      %p42 = scmp.ne.s32.totalorder %s31, %s32
      %p43 = scmp.eq.s32.totalorder %s23, 0
      %p44 = por %p42, %p43
      %p45 = scmp.ne.s32.totalorder %s31, %s32
      %p46 = scmp.eq.s32.totalorder %s24, 1
      %p47 = por %p45, %p46
      %p49 = scmp.ne.s32.totalorder %s32, %s48
      %p50 = scmp.eq.s32.totalorder %s24, 0
      %p51 = por %p49, %p50
      %s52 = ssub.s32 %s18, %s25
      %p53 = scmp.eq.s32.totalorder %s52, 0
      %s55 = sadd.s32 %s54, 1
      %s56 = scalar_select %p53, %s54, %s55
      %p59 = pneg %p53
      %p60 = scmp.eq.s32.totalorder %s18, 1
      %p61 = por %p59, %p60
      %p62 = scmp.ne.s32.totalorder %s54, %s57
      %p63 = scmp.eq.s32.totalorder %s18, 0
      %p64 = por %p62, %p63
      %p65 = scmp.ne.s32.totalorder %s54, %s57
      %p66 = scmp.eq.s32.totalorder %s23, 1
      %p67 = por %p65, %p66
      %p68 = scmp.ne.s32.totalorder %s57, %s58
      %p69 = scmp.eq.s32.totalorder %s23, 0
      %p70 = por %p68, %p69
      %p71 = scmp.ne.s32.totalorder %s57, %s58
      %p72 = scmp.eq.s32.totalorder %s24, 1
      %p73 = por %p71, %p72
      %p75 = scmp.ne.s32.totalorder %s58, %s74
      %p76 = scmp.eq.s32.totalorder %s24, 0
      %p77 = por %p75, %p76
      %s79 = sadd.s32 %s78, 1
      %p82 = scmp.eq.s32.totalorder %s18, 1
      %p83 = scmp.ne.s32.totalorder %s78, %s80
      %p84 = scmp.eq.s32.totalorder %s18, 0
      %p85 = por %p83, %p84
      %p86 = scmp.ne.s32.totalorder %s78, %s80
      %p87 = scmp.eq.s32.totalorder %s23, 1
      %p88 = por %p86, %p87
      %p89 = scmp.ne.s32.totalorder %s80, %s81
      %p90 = scmp.eq.s32.totalorder %s23, 0
      %p91 = por %p89, %p90
      %p92 = scmp.ne.s32.totalorder %s80, %s81
      %p93 = scmp.eq.s32.totalorder %s24, 1
      %p94 = por %p92, %p93
      %p96 = scmp.ne.s32.totalorder %s81, %s95
      %p97 = scmp.eq.s32.totalorder %s24, 0
      %p98 = por %p96, %p97
      %s100 = sadd.s32 %s99, 1
      %p103 = scmp.eq.s32.totalorder %s18, 1
      %p104 = scmp.ne.s32.totalorder %s99, %s101
      %p105 = scmp.eq.s32.totalorder %s18, 0
      %p106 = por %p104, %p105
      %p107 = scmp.ne.s32.totalorder %s99, %s101
      %p108 = scmp.eq.s32.totalorder %s23, 1
      %p109 = por %p107, %p108
      %p110 = scmp.ne.s32.totalorder %s101, %s102
      %p111 = scmp.eq.s32.totalorder %s23, 0
      %p112 = por %p110, %p111
      %p113 = scmp.ne.s32.totalorder %s101, %s102
      %p114 = scmp.eq.s32.totalorder %s24, 1
      %p115 = por %p113, %p114
      %p117 = scmp.ne.s32.totalorder %s102, %s116
      %p118 = scmp.eq.s32.totalorder %s24, 0
      %p119 = por %p117, %p118
      %s121 = sadd.s32 %s120, 1
      %p124 = scmp.eq.s32.totalorder %s18, 1
      %p125 = scmp.ne.s32.totalorder %s120, %s122
      %p126 = scmp.eq.s32.totalorder %s18, 0
      %p127 = por %p125, %p126
      %p128 = scmp.ne.s32.totalorder %s120, %s122
      %p129 = scmp.eq.s32.totalorder %s23, 1
      %p130 = por %p128, %p129
      %p131 = scmp.ne.s32.totalorder %s122, %s123
      %p132 = scmp.eq.s32.totalorder %s23, 0
      %p133 = por %p131, %p132
      %p134 = scmp.ne.s32.totalorder %s122, %s123
      %p135 = scmp.eq.s32.totalorder %s24, 1
      %p136 = por %p134, %p135
      %p138 = scmp.ne.s32.totalorder %s123, %s137
      %p139 = scmp.eq.s32.totalorder %s24, 0
      %p140 = por %p138, %p139
      %s142 = sadd.s32 %s141, 1
      %p145 = scmp.eq.s32.totalorder %s18, 1
      %p146 = scmp.ne.s32.totalorder %s141, %s143
      %p147 = scmp.eq.s32.totalorder %s18, 0
      %p148 = por %p146, %p147
      %p149 = scmp.ne.s32.totalorder %s141, %s143
      %p150 = scmp.eq.s32.totalorder %s23, 1
      %p151 = por %p149, %p150
      %p152 = scmp.ne.s32.totalorder %s143, %s144
      %p153 = scmp.eq.s32.totalorder %s23, 0
      %p154 = por %p152, %p153
      %p155 = scmp.ne.s32.totalorder %s143, %s144
      %p156 = scmp.eq.s32.totalorder %s24, 1
      %p157 = por %p155, %p156
      %p159 = scmp.ne.s32.totalorder %s144, %s158
      %p160 = scmp.eq.s32.totalorder %s24, 0
      %p161 = por %p159, %p160
      %s163 = sadd.s32 %s162, 1
      %p166 = scmp.eq.s32.totalorder %s18, 1
      %p167 = scmp.ne.s32.totalorder %s162, %s164
      %p168 = scmp.eq.s32.totalorder %s18, 0
      %p169 = por %p167, %p168
      %p170 = scmp.ne.s32.totalorder %s162, %s164
      %p171 = scmp.eq.s32.totalorder %s23, 1
      %p172 = por %p170, %p171
      %p173 = scmp.ne.s32.totalorder %s164, %s165
      %p174 = scmp.eq.s32.totalorder %s23, 0
      %p175 = por %p173, %p174
      %p176 = scmp.ne.s32.totalorder %s164, %s165
      %p177 = scmp.eq.s32.totalorder %s24, 1
      %p178 = por %p176, %p177
      %p180 = scmp.ne.s32.totalorder %s165, %s179
      %p181 = scmp.eq.s32.totalorder %s24, 0
      %p182 = por %p180, %p181
      %s184 = sadd.s32 %s183, 1
      %p187 = scmp.eq.s32.totalorder %s18, 1
      %p188 = scmp.ne.s32.totalorder %s183, %s185
      %p189 = scmp.eq.s32.totalorder %s18, 0
      %p190 = por %p188, %p189
      %p191 = scmp.ne.s32.totalorder %s183, %s185
      %p192 = scmp.eq.s32.totalorder %s23, 1
      %p193 = por %p191, %p192
      %p194 = scmp.ne.s32.totalorder %s185, %s186
      %p195 = scmp.eq.s32.totalorder %s23, 0
      %p196 = por %p194, %p195
      %p197 = scmp.ne.s32.totalorder %s185, %s186
      %p198 = scmp.eq.s32.totalorder %s24, 1
      %p199 = por %p197, %p198
      %p201 = scmp.ne.s32.totalorder %s186, %s200
      %p202 = scmp.eq.s32.totalorder %s24, 0
      %p203 = por %p201, %p202
      %s205 = sadd.s32 %s204, 1
      %p208 = scmp.eq.s32.totalorder %s18, 1
      %p209 = scmp.ne.s32.totalorder %s204, %s206
      %p210 = scmp.eq.s32.totalorder %s18, 0
      %p211 = por %p209, %p210
      %p212 = scmp.ne.s32.totalorder %s204, %s206
      %p213 = scmp.eq.s32.totalorder %s23, 1
      %p214 = por %p212, %p213
      %p215 = scmp.ne.s32.totalorder %s206, %s207
      %p216 = scmp.eq.s32.totalorder %s23, 0
      %p217 = por %p215, %p216
      %p218 = scmp.ne.s32.totalorder %s206, %s207
      %p219 = scmp.eq.s32.totalorder %s24, 1
      %p220 = por %p218, %p219
      %p222 = scmp.ne.s32.totalorder %s207, %s221
      %p223 = scmp.eq.s32.totalorder %s24, 0
      %p224 = por %p222, %p223
      %s226 = sadd.s32 %s225, 1
      %p229 = scmp.eq.s32.totalorder %s18, 1
      %p230 = scmp.ne.s32.totalorder %s225, %s227
      %p231 = scmp.eq.s32.totalorder %s18, 0
      %p232 = por %p230, %p231
      %p233 = scmp.ne.s32.totalorder %s225, %s227
      %p234 = scmp.eq.s32.totalorder %s23, 1
      %p235 = por %p233, %p234
      %p236 = scmp.ne.s32.totalorder %s227, %s228
      %p237 = scmp.eq.s32.totalorder %s23, 0
      %p238 = por %p236, %p237
      %p239 = scmp.ne.s32.totalorder %s227, %s228
      %p240 = scmp.eq.s32.totalorder %s24, 1
      %p241 = por %p239, %p240
      %p243 = scmp.ne.s32.totalorder %s228, %s242
      %p244 = scmp.eq.s32.totalorder %s24, 0
      %p245 = por %p243, %p244
      %s246 = ssub.s32 %s18, %s25
      %p247 = scmp.eq.s32.totalorder %s246, 0
      %s249 = sadd.s32 %s248, 1
      %s250 = scalar_select %p247, %s248, %s249
      %p253 = pneg %p247
      %p254 = scmp.eq.s32.totalorder %s18, 1
      %p255 = por %p253, %p254
      %p256 = scmp.ne.s32.totalorder %s248, %s251
      %p257 = scmp.eq.s32.totalorder %s18, 0
      %p258 = por %p256, %p257
      %p259 = scmp.ne.s32.totalorder %s248, %s251
      %p260 = scmp.eq.s32.totalorder %s23, 1
      %p261 = por %p259, %p260
      %p262 = scmp.ne.s32.totalorder %s251, %s252
      %p263 = scmp.eq.s32.totalorder %s23, 0
      %p264 = por %p262, %p263
      %p265 = scmp.ne.s32.totalorder %s251, %s252
      %p266 = scmp.eq.s32.totalorder %s24, 1
      %p267 = por %p265, %p266
      %p269 = scmp.ne.s32.totalorder %s252, %s268
      %p270 = scmp.eq.s32.totalorder %s24, 0
      %p271 = por %p269, %p270
      %p272 = scmp.le.s32.totalorder 1, %s18
      %p273 = scmp.lt.s32.totalorder %s18, 3
      %p274 = pnand %p272, %p273
      %p275 = pneg %p274
      // Predicated region
      $region9: #{multiview_qformer_layer_forward.1} parent=5 // pred_check
        _
      $region10: #{multiview_qformer_layer_forward.1} parent=5 // pred_check_branch
        %277 = sbr.rel (%p274) target = $region12
      $region11: #{multiview_qformer_layer_forward.1} parent=5 // pred_region
        %s278 = ssub.s32 %s18, 1
        // Predicated region
        $region13: #{multiview_qformer_layer_forward.1} parent=11 // pred_check
          %p279 = pneg %p91
        $region14: #{multiview_qformer_layer_forward.1} parent=11 // pred_check_branch
          %281 = sbr.rel (%p279) target = $region16
        $region15: #{multiview_qformer_layer_forward.1} parent=11 // pred_region
          %s283 = ssub.s32 3072, 3072
          %284 = vsyncadd [#allocation3], %s283
          %s285 = sshll.u32 [#allocation2], 4
          %s286 = int_to_ptr.vmem [resolvable:$true] %s285
          %291 = dma.hbm_to_vmem [thread:$0]  %s2, 3072, %s286, [#allocation3], 192, 192, 12
        $region16: #{multiview_qformer_layer_forward.1} parent=11 // pred_fallthru
          _
        // Predicated region
        $region17: #{multiview_qformer_layer_forward.1} parent=11 // pred_check
          %p292 = pneg %p112
        $region18: #{multiview_qformer_layer_forward.1} parent=11 // pred_check_branch
          %294 = sbr.rel (%p292) target = $region20
        $region19: #{multiview_qformer_layer_forward.1} parent=11 // pred_region
          _
        $region20: #{multiview_qformer_layer_forward.1} parent=11 // pred_fallthru
          _
        // Predicated region
        $region21: #{multiview_qformer_layer_forward.1} parent=11 // pred_check
          %p295 = pneg %p133
        $region22: #{multiview_qformer_layer_forward.1} parent=11 // pred_check_branch
          %297 = sbr.rel (%p295) target = $region24
        $region23: #{multiview_qformer_layer_forward.1} parent=11 // pred_region
          _
        $region24: #{multiview_qformer_layer_forward.1} parent=11 // pred_fallthru
          _
        // Predicated region
        $region25: #{multiview_qformer_layer_forward.1} parent=11 // pred_check
          %p298 = pneg %p154
        $region26: #{multiview_qformer_layer_forward.1} parent=11 // pred_check_branch
          %300 = sbr.rel (%p298) target = $region28
        $region27: #{multiview_qformer_layer_forward.1} parent=11 // pred_region
          _
        $region28: #{multiview_qformer_layer_forward.1} parent=11 // pred_fallthru
          _
        // Predicated region
        $region29: #{multiview_qformer_layer_forward.1} parent=11 // pred_check
          %p301 = pneg %p175
        $region30: #{multiview_qformer_layer_forward.1} parent=11 // pred_check_branch
          %303 = sbr.rel (%p301) target = $region32
        $region31: #{multiview_qformer_layer_forward.1} parent=11 // pred_region
          %s305 = ssub.s32 4096, 4096
          %306 = vsyncadd [#allocation5], %s305
          %s307 = sshll.u32 [#allocation4], 4
          %s308 = int_to_ptr.vmem [resolvable:$true] %s307
          %313 = dma.hbm_to_vmem [thread:$0]  %s6, 4096, %s308, [#allocation5], 256, 256, 16
        $region32: #{multiview_qformer_layer_forward.1} parent=11 // pred_fallthru
          _
        // Predicated region
        $region33: #{multiview_qformer_layer_forward.1} parent=11 // pred_check
          %p314 = pneg %p196
        $region34: #{multiview_qformer_layer_forward.1} parent=11 // pred_check_branch
          %316 = sbr.rel (%p314) target = $region36
        $region35: #{multiview_qformer_layer_forward.1} parent=11 // pred_region
          _
        $region36: #{multiview_qformer_layer_forward.1} parent=11 // pred_fallthru
          _
        // Predicated region
        $region37: #{multiview_qformer_layer_forward.1} parent=11 // pred_check
          %p317 = pneg %p217
        $region38: #{multiview_qformer_layer_forward.1} parent=11 // pred_check_branch
          %319 = sbr.rel (%p317) target = $region40
        $region39: #{multiview_qformer_layer_forward.1} parent=11 // pred_region
          %s321 = ssub.s32 4096, 4096
          %322 = vsyncadd [#allocation5], %s321
          %s323 = sshll.u32 [#allocation6], 4
          %s324 = int_to_ptr.vmem [resolvable:$true] %s323
          %329 = dma.hbm_to_vmem [thread:$0]  %s8, 4096, %s324, [#allocation5], 64, 64, 4
        $region40: #{multiview_qformer_layer_forward.1} parent=11 // pred_fallthru
          _
        // Predicated region
        $region41: #{multiview_qformer_layer_forward.1} parent=11 // pred_check
          %p330 = pneg %p238
        $region42: #{multiview_qformer_layer_forward.1} parent=11 // pred_check_branch
          %332 = sbr.rel (%p330) target = $region44
        $region43: #{multiview_qformer_layer_forward.1} parent=11 // pred_region
          _
        $region44: #{multiview_qformer_layer_forward.1} parent=11 // pred_fallthru
          _
      $region12: #{multiview_qformer_layer_forward.1} parent=5 // pred_fallthru
        _
      %p333 = scmp.lt.s32.totalorder %s18, 2
      // Predicated region
      $region45: #{multiview_qformer_layer_forward.1} parent=5 // pred_check
        %p334 = pneg %p333
      $region46: #{multiview_qformer_layer_forward.1} parent=5 // pred_check_branch
        %336 = sbr.rel (%p334) target = $region48
      $region47: #{multiview_qformer_layer_forward.1} parent=5 // pred_region
        // Predicated region
        $region49: #{multiview_qformer_layer_forward.1} parent=47 // pred_check
          %p337 = pneg %p38
        $region50: #{multiview_qformer_layer_forward.1} parent=47 // pred_check_branch
          %339 = sbr.rel (%p337) target = $region52
        $region51: #{multiview_qformer_layer_forward.1} parent=47 // pred_region
          %p340 = scmp.lt.s32.totalorder %s18, 1
          %s341 = scalar_select %p340, %s18, 1
          %s342 = smul.addr %s341, 8
          %s343 = scalar_lea.vmem %s0, %s342
        $region52: #{multiview_qformer_layer_forward.1} parent=47 // pred_fallthru
          _
        // Predicated region
        $region53: #{multiview_qformer_layer_forward.1} parent=47 // pred_check
          %p344 = pneg %p64
        $region54: #{multiview_qformer_layer_forward.1} parent=47 // pred_check_branch
          %346 = sbr.rel (%p344) target = $region56
        $region55: #{multiview_qformer_layer_forward.1} parent=47 // pred_region
          %p347 = scmp.lt.s32.totalorder %s18, 1
          %s348 = scalar_select %p347, %s18, 1
          %s349 = smul.addr %s348, 8
          %s350 = scalar_lea.vmem %s1, %s349
        $region56: #{multiview_qformer_layer_forward.1} parent=47 // pred_fallthru
          _
      $region48: #{multiview_qformer_layer_forward.1} parent=5 // pred_fallthru
        _
      %p351 = scmp.le.s32.totalorder 1, %s18
      %p352 = scmp.lt.s32.totalorder %s18, 3
      %p353 = pnand %p351, %p352
      %p354 = pneg %p353
      // Predicated region
      $region57: #{multiview_qformer_layer_forward.1} parent=5 // pred_check
        _
      $region58: #{multiview_qformer_layer_forward.1} parent=5 // pred_check_branch
        %356 = sbr.rel (%p353) target = $region60
      $region59: #{multiview_qformer_layer_forward.1} parent=5 // pred_region
        %s357 = ssub.s32 %s18, 1
        // Predicated region
        $region61: #{multiview_qformer_layer_forward.1} parent=59 // pred_check
          %p358 = pneg %p91
        $region62: #{multiview_qformer_layer_forward.1} parent=59 // pred_check_branch
          %360 = sbr.rel (%p358) target = $region64
        $region63: #{multiview_qformer_layer_forward.1} parent=59 // pred_region
          %361 = dma.done [#allocation3], 3072
        $region64: #{multiview_qformer_layer_forward.1} parent=59 // pred_fallthru
          _
        // Predicated region
        $region65: #{multiview_qformer_layer_forward.1} parent=59 // pred_check
          %p362 = pneg %p175
        $region66: #{multiview_qformer_layer_forward.1} parent=59 // pred_check_branch
          %364 = sbr.rel (%p362) target = $region68
        $region67: #{multiview_qformer_layer_forward.1} parent=59 // pred_region
          %365 = dma.done [#allocation5], 4096
        $region68: #{multiview_qformer_layer_forward.1} parent=59 // pred_fallthru
          _
        // Predicated region
        $region69: #{multiview_qformer_layer_forward.1} parent=59 // pred_check
          %p366 = pneg %p217
        $region70: #{multiview_qformer_layer_forward.1} parent=59 // pred_check_branch
          %368 = sbr.rel (%p366) target = $region72
        $region71: #{multiview_qformer_layer_forward.1} parent=59 // pred_region
          %369 = dma.done [#allocation5], 4096
        $region72: #{multiview_qformer_layer_forward.1} parent=59 // pred_fallthru
          _
        %p370 = scmp.lt.s32.totalorder %s23, 1
        %s371 = scalar_select %p370, %s23, 1
        %s372 = smul.addr %s371, 8
        %s373 = scalar_lea.vmem %s0, %s372
        %p374 = pneg %p44
        %p375 = pneg %p41
        %p376 = scmp.lt.s32.totalorder %s23, 1
        %s377 = scalar_select %p376, %s23, 1
        %s378 = smul.addr %s377, 8
        %s379 = scalar_lea.vmem %s1, %s378
        %p380 = pneg %p70
        %p381 = pneg %p67
        %p382 = pneg %p91
        %p383 = pneg %p88
        %p384 = pneg %p112
        %p385 = pneg %p109
        %p386 = pneg %p133
        %p387 = pneg %p130
        %p388 = pneg %p154
        %p389 = pneg %p151
        %p390 = pneg %p175
        %p391 = pneg %p172
        %p392 = pneg %p196
        %p393 = pneg %p193
        %p394 = pneg %p217
        %p395 = pneg %p214
        %p396 = pneg %p238
        %p397 = pneg %p235
        %p398 = pneg %p264
        %p399 = pneg %p261
        %p400 = scmp.lt.s32.totalorder %s23, 1
        %s401 = scalar_select %p400, %s23, 1
        %s402 = smul.addr %s401, 8
        %s403 = scalar_lea.vmem %s10, %s402
        %p404 = scmp.lt.s32.totalorder %s23, 1
        %s405 = scalar_select %p404, %s23, 1
        %s406 = smul.addr %s405, 8
        %s407 = scalar_lea.vmem %s0, %s406
        %p408 = scmp.lt.s32.totalorder %s23, 1
        %s409 = scalar_select %p408, %s23, 1
        %s410 = smul.addr %s409, 8
        %s411 = scalar_lea.vmem %s1, %s410
        %p412 = scmp.lt.s32.totalorder %s23, 1
        %s413 = scalar_select %p412, %s23, 1
        %s414 = smul.addr %s413, 8
        %s415 = scalar_lea.vmem %s10, %s414
        %v417 = vld [vmem:[%s407] sm:$0xff]
        %v418 = vld [vmem:[%s411] sm:$0xff]
        %v419 = vld [vmem:[#allocation2] sm:$0xff]
        %v420 = vld [vmem:[#allocation2 + $0x8] sm:$0xf]
        %v421 = vld [vmem:[#allocation2 + $0xc] sm:$0xff]
        %v422 = vld [vmem:[#allocation2 + $0x14] sm:$0xf]
        %v423 = vld [vmem:[#allocation2 + $0x18] sm:$0xff]
        %v424 = vld [vmem:[#allocation2 + $0x20] sm:$0xf]
        %v425 = vld [vmem:[#allocation2 + $0x24] sm:$0xff]
        %v426 = vld [vmem:[#allocation2 + $0x2c] sm:$0xf]
        %v427 = vld [vmem:[#allocation2 + $0x30] sm:$0xff]
        %v428 = vld [vmem:[#allocation2 + $0x38] sm:$0xf]
        %v429 = vld [vmem:[#allocation2 + $0x3c] sm:$0xff]
        %v430 = vld [vmem:[#allocation2 + $0x44] sm:$0xf]
        %v431 = vld [vmem:[#allocation2 + $0x48] sm:$0xff]
        %v432 = vld [vmem:[#allocation2 + $0x50] sm:$0xf]
        %v433 = vld [vmem:[#allocation2 + $0x54] sm:$0xff]
        %v434 = vld [vmem:[#allocation2 + $0x5c] sm:$0xf]
        %v435 = vld [vmem:[#allocation2 + $0x60] sm:$0xff]
        %v436 = vld [vmem:[#allocation2 + $0x68] sm:$0xf]
        %v437 = vld [vmem:[#allocation2 + $0x6c] sm:$0xff]
        %v438 = vld [vmem:[#allocation2 + $0x74] sm:$0xf]
        %v439 = vld [vmem:[#allocation2 + $0x78] sm:$0xff]
        %v440 = vld [vmem:[#allocation2 + $0x80] sm:$0xf]
        %v441 = vld [vmem:[#allocation2 + $0x84] sm:$0xff]
        %v442 = vld [vmem:[#allocation2 + $0x8c] sm:$0xf]
        %v443 = vld [vmem:[#allocation2 + $0x90] sm:$0xff]
        %v444 = vld [vmem:[#allocation2 + $0x98] sm:$0xf]
        %v445 = vld [vmem:[#allocation2 + $0x9c] sm:$0xff]
        %v446 = vld [vmem:[#allocation2 + $0xa4] sm:$0xf]
        %v447 = vld [vmem:[#allocation2 + $0xa8] sm:$0xff]
        %v448 = vld [vmem:[#allocation2 + $0xb0] sm:$0xf]
        %v449 = vld [vmem:[#allocation2 + $0xb4] sm:$0xff]
        %v450 = vld [vmem:[#allocation2 + $0xbc] sm:$0xf]
        %v451 = vpack.c.bf16 %v418, %v417
        %v452 = vld [vmem:[%s3] sm:$0x7]
        %v454 = vlaneseq
        %v455 = vshrl.u32 %v454, 7
        %v456 = vsub.s32 0, %v455
        %v457 = vrot.slane %v452, %v456
        %v458 = vlaneseq
        %v459 = vshrl.u32 %v458, 7
        %v460 = vsub.s32 1, %v459
        %v461 = vrot.slane %v452, %v460
        %v462 = vlaneseq
        %v463 = vshrl.u32 %v462, 7
        %v464 = vsub.s32 2, %v463
        %v465 = vrot.slane %v452, %v464
        %v501 = vunpack.c.l.b16 %v419
        %v502 = vunpack.c.h.b16 %v419
        %v503 = vunpack.c.l.b16 %v420
        %v504 = vunpack.c.l.b16 %v421
        %v505 = vunpack.c.h.b16 %v421
        %v506 = vunpack.c.l.b16 %v422
        %v507 = vunpack.c.l.b16 %v423
        %v508 = vunpack.c.h.b16 %v423
        %v509 = vunpack.c.l.b16 %v424
        %v510 = vunpack.c.l.b16 %v425
        %v511 = vunpack.c.h.b16 %v425
        %v512 = vunpack.c.l.b16 %v426
        %v513 = vunpack.c.l.b16 %v427
        %v514 = vunpack.c.h.b16 %v427
        %v515 = vunpack.c.l.b16 %v428
        %v516 = vunpack.c.l.b16 %v429
        %v517 = vunpack.c.h.b16 %v429
        %v518 = vunpack.c.l.b16 %v430
        %v519 = vunpack.c.l.b16 %v431
        %v520 = vunpack.c.h.b16 %v431
        %v521 = vunpack.c.l.b16 %v432
        %v522 = vunpack.c.l.b16 %v433
        %v523 = vunpack.c.h.b16 %v433
        %v524 = vunpack.c.l.b16 %v434
        %v525 = vunpack.c.l.b16 %v435
        %v526 = vunpack.c.h.b16 %v435
        %v527 = vunpack.c.l.b16 %v436
        %v528 = vunpack.c.l.b16 %v437
        %v529 = vunpack.c.h.b16 %v437
        %v530 = vunpack.c.l.b16 %v438
        %v531 = vunpack.c.l.b16 %v439
        %v532 = vunpack.c.h.b16 %v439
        %v533 = vunpack.c.l.b16 %v440
        %v534 = vunpack.c.l.b16 %v441
        %v535 = vunpack.c.h.b16 %v441
        %v536 = vunpack.c.l.b16 %v442
        %v537 = vunpack.c.l.b16 %v443
        %v538 = vunpack.c.h.b16 %v443
        %v539 = vunpack.c.l.b16 %v444
        %v540 = vunpack.c.l.b16 %v445
        %v541 = vunpack.c.h.b16 %v445
        %v542 = vunpack.c.l.b16 %v446
        %v543 = vunpack.c.l.b16 %v447
        %v544 = vunpack.c.h.b16 %v447
        %v545 = vunpack.c.l.b16 %v448
        %v546 = vunpack.c.l.b16 %v449
        %v547 = vunpack.c.h.b16 %v449
        %v548 = vunpack.c.l.b16 %v450
        %v549 = vpack.c.b16 %v504, %v501
        %v550 = vpack.c.b16 %v505, %v502
        %v551 = vpack.c.b16 %v506, %v503
        %v552 = vpack.c.b16 %v510, %v507
        %v553 = vpack.c.b16 %v511, %v508
        %v554 = vpack.c.b16 %v512, %v509
        %v555 = vpack.c.b16 %v516, %v513
        %v556 = vpack.c.b16 %v517, %v514
        %v557 = vpack.c.b16 %v518, %v515
        %v558 = vpack.c.b16 %v522, %v519
        %v559 = vpack.c.b16 %v523, %v520
        %v560 = vpack.c.b16 %v524, %v521
        %v561 = vpack.c.b16 %v528, %v525
        %v562 = vpack.c.b16 %v529, %v526
        %v563 = vpack.c.b16 %v530, %v527
        %v564 = vpack.c.b16 %v534, %v531
        %v565 = vpack.c.b16 %v535, %v532
        %v566 = vpack.c.b16 %v536, %v533
        %v567 = vpack.c.b16 %v540, %v537
        %v568 = vpack.c.b16 %v541, %v538
        %v569 = vpack.c.b16 %v542, %v539
        %v570 = vpack.c.b16 %v546, %v543
        %v571 = vpack.c.b16 %v547, %v544
        %v572 = vpack.c.b16 %v548, %v545
        %597 = vmatprep.subr.bf16.mxu0 %v550
        %598 = vmatpush1.bf16.msra.mxu0 %v549
        %599 = vmatprep.subr.bf16.mxu0 %v553
        %600 = vmatpush1.bf16.msra.mxu0 %v552
        %601 = vmatprep.subr.bf16.mxu0 %v556
        %602 = vmatpush1.bf16.msra.mxu0 %v555
        %603 = vmatprep.subr.bf16.mxu0 %v559
        %604 = vmatpush1.bf16.msra.mxu0 %v558
        %605 = vmatprep.subr.bf16.mxu0 %v562
        %606 = vmatpush1.bf16.msra.mxu0 %v561
        %607 = vmatprep.subr.bf16.mxu0 %v565
        %608 = vmatpush1.bf16.msra.mxu0 %v564
        %609 = vmatprep.subr.bf16.mxu0 %v568
        %610 = vmatpush1.bf16.msra.mxu0 %v567
        %611 = vmatprep.subr.bf16.mxu0 %v571
        %612 = vmatpush1.bf16.msra.mxu0 %v570
        %613 = vmatprep.subr.bf16.mxu0 0
        %614 = vmatpush1.bf16.msra.mxu0 0
        %615 = vmatprep.subr.bf16.mxu0 0
        %616 = vmatpush1.bf16.msra.mxu0 0
        %617 = vmatprep.subr.bf16.mxu0 0
        %618 = vmatpush1.bf16.msra.mxu0 0
        %619 = vmatprep.subr.bf16.mxu0 0
        %620 = vmatpush1.bf16.msra.mxu0 0
        %621 = vmatprep.subr.bf16.mxu0 0
        %622 = vmatpush1.bf16.msra.mxu0 0
        %623 = vmatprep.subr.bf16.mxu0 0
        %624 = vmatpush1.bf16.msra.mxu0 0
        %625 = vmatprep.subr.bf16.mxu0 0
        %626 = vmatpush1.bf16.msra.mxu0 0
        %627 = vmatprep.subr.bf16.mxu0 0
        %628 = vmatpush1.bf16.msra.mxu0 0
        %629 = vmatprep.mubr.bf16.mxu0 0
        %630 = vmatmul.mubr.bf16.gmra.mrb[0].mxu0 %v451
        %v631 = vpop.f32.mrb[0].mxu0
        %v632 = vadd.f32 %v457, %v631
        %v633 = vpop.f32.mrb[0].mxu0
        %v634 = vadd.f32 %v461, %v633
        %v635 = vpop.f32.mrb[0].mxu0
        %v636 = vpop.f32.mrb[0].mxu0
        %v637 = vadd.f32 %v461, %v636
        %638 = vdwg.mxu0
        %639 = vmatprep.subr.bf16.mxu0 0
        %640 = vmatpush1.bf16.msra.mxu0 %v551
        %641 = vmatprep.subr.bf16.mxu0 0
        %642 = vmatpush1.bf16.msra.mxu0 %v554
        %643 = vmatprep.subr.bf16.mxu0 0
        %644 = vmatpush1.bf16.msra.mxu0 %v557
        %645 = vmatprep.subr.bf16.mxu0 0
        %646 = vmatpush1.bf16.msra.mxu0 %v560
        %647 = vmatprep.subr.bf16.mxu0 0
        %648 = vmatpush1.bf16.msra.mxu0 %v563
        %649 = vmatprep.subr.bf16.mxu0 0
        %650 = vmatpush1.bf16.msra.mxu0 %v566
        %651 = vmatprep.subr.bf16.mxu0 0
        %652 = vmatpush1.bf16.msra.mxu0 %v569
        %653 = vmatprep.subr.bf16.mxu0 0
        %654 = vmatpush1.bf16.msra.mxu0 %v572
        %655 = vmatprep.subr.bf16.mxu0 0
        %656 = vmatpush1.bf16.msra.mxu0 0
        %657 = vmatprep.subr.bf16.mxu0 0
        %658 = vmatpush1.bf16.msra.mxu0 0
        %659 = vmatprep.subr.bf16.mxu0 0
        %660 = vmatpush1.bf16.msra.mxu0 0
        %661 = vmatprep.subr.bf16.mxu0 0
        %662 = vmatpush1.bf16.msra.mxu0 0
        %663 = vmatprep.subr.bf16.mxu0 0
        %664 = vmatpush1.bf16.msra.mxu0 0
        %665 = vmatprep.subr.bf16.mxu0 0
        %666 = vmatpush1.bf16.msra.mxu0 0
        %667 = vmatprep.subr.bf16.mxu0 0
        %668 = vmatpush1.bf16.msra.mxu0 0
        %669 = vmatprep.subr.bf16.mxu0 0
        %670 = vmatpush1.bf16.msra.mxu0 0
        %671 = vmatprep.mubr.bf16.mxu0 0
        %672 = vmatmul.mubr.bf16.gmra.mrb[0].mxu0 %v451
        %v673 = vpop.f32.mrb[0].mxu0
        %v674 = vadd.f32 %v465, %v673
        %v675 = vpop.f32.mrb[0].mxu0
        %v676 = vpop.f32.mrb[0].mxu0
        %v677 = vadd.f32 %v465, %v676
        %v678 = vpop.f32.mrb[0].mxu0
        %679 = vdwg.mxu0
        %v680 = vpack.c.bf16 %v632, %v632
        %v681 = vpack.c.bf16 %v637, %v634
        %682 = vmatprep.subr.bf16.mxu0 0
        %683 = vmatpush1.bf16.xpose.msra.mxu0 %v681
        %684 = vmatprep.subr.bf16.mxu0 0
        %685 = vmatpush1.bf16.xpose.msra.mxu0 0
        %686 = vmatprep.subr.bf16.mxu0 0
        %687 = vmatpush1.bf16.xpose.msra.mxu0 0
        %688 = vmatprep.subr.bf16.mxu0 0
        %689 = vmatpush1.bf16.xpose.msra.mxu0 0
        %690 = vmatprep.subr.bf16.mxu0 0
        %691 = vmatpush1.bf16.xpose.msra.mxu0 0
        %692 = vmatprep.subr.bf16.mxu0 0
        %693 = vmatpush1.bf16.xpose.msra.mxu0 0
        %694 = vmatprep.subr.bf16.mxu0 0
        %695 = vmatpush1.bf16.xpose.msra.mxu0 0
        %696 = vmatprep.subr.bf16.mxu0 0
        %697 = vmatpush1.bf16.xpose.msra.mxu0 0
        %698 = vmatprep.subr.bf16.mxu0 0
        %699 = vmatpush1.bf16.xpose.msra.mxu0 0
        %700 = vmatprep.subr.bf16.mxu0 0
        %701 = vmatpush1.bf16.xpose.msra.mxu0 0
        %702 = vmatprep.subr.bf16.mxu0 0
        %703 = vmatpush1.bf16.xpose.msra.mxu0 0
        %704 = vmatprep.subr.bf16.mxu0 0
        %705 = vmatpush1.bf16.xpose.msra.mxu0 0
        %706 = vmatprep.subr.bf16.mxu0 0
        %707 = vmatpush1.bf16.xpose.msra.mxu0 0
        %708 = vmatprep.subr.bf16.mxu0 0
        %709 = vmatpush1.bf16.xpose.msra.mxu0 0
        %710 = vmatprep.subr.bf16.mxu0 0
        %711 = vmatpush1.bf16.xpose.msra.mxu0 0
        %712 = vmatprep.subr.bf16.mxu0 0
        %713 = vmatpush1.bf16.xpose.msra.mxu0 0
        %714 = vmatprep.mubr.bf16.mxu0 0
        %715 = vmatmul.mubr.bf16.gmra.mrb[0].mxu0 %v680
        %v716 = vpop.f32.mrb[0].mxu0
        %v717 = vadd.f32 0.0, %v716
        %v718 = vpop.f32.mrb[0].mxu0
        %v719 = vpop.f32.mrb[0].mxu0
        %v720 = vpop.f32.mrb[0].mxu0
        %721 = vdwg.mxu0
        %v722 = vmul.f32 %v717, 0.088388346
        %vm723 = vcmask 130048
        %v724 = vsel %vm723, %v722, -inf
        %725 = vmax.xlane.f32.xlu0 %v724
        %v726 = vpop.xlane.xlu0 %725
        %v727 = vsub.f32 %v722, %v726
        %v728 = vmul.f32 %v727, 1.442695
        %v729 = vpow.pop %v728
        %v730 = vsel %vm723, %v729, 0.0
        %731 = vadd.xlane.f32.xlu0 %v730
        %v732 = vpop.xlane.xlu0 %731
        %v733 = vrcp.pop %v732
        %v734 = vmul.f32 %v729, %v733
        %v735 = vpack.c.bf16 %v734, %v734
        %v736 = vpack.c.bf16 %v677, %v674
        %v738 = vsel %vm723, %v735, 0
        %740 = vmatprep.subr.bf16.mxu0 0
        %741 = vmatpush1.bf16.msra.mxu0 %v736
        %742 = vmatprep.subr.bf16.mxu0 0
        %743 = vmatpush1.bf16.msra.mxu0 0
        %744 = vmatprep.subr.bf16.mxu0 0
        %745 = vmatpush1.bf16.msra.mxu0 0
        %746 = vmatprep.subr.bf16.mxu0 0
        %747 = vmatpush1.bf16.msra.mxu0 0
        %748 = vmatprep.subr.bf16.mxu0 0
        %749 = vmatpush1.bf16.msra.mxu0 0
        %750 = vmatprep.subr.bf16.mxu0 0
        %751 = vmatpush1.bf16.msra.mxu0 0
        %752 = vmatprep.subr.bf16.mxu0 0
        %753 = vmatpush1.bf16.msra.mxu0 0
        %754 = vmatprep.subr.bf16.mxu0 0
        %755 = vmatpush1.bf16.msra.mxu0 0
        %756 = vmatprep.subr.bf16.mxu0 0
        %757 = vmatpush1.bf16.msra.mxu0 0
        %758 = vmatprep.subr.bf16.mxu0 0
        %759 = vmatpush1.bf16.msra.mxu0 0
        %760 = vmatprep.subr.bf16.mxu0 0
        %761 = vmatpush1.bf16.msra.mxu0 0
        %762 = vmatprep.subr.bf16.mxu0 0
        %763 = vmatpush1.bf16.msra.mxu0 0
        %764 = vmatprep.subr.bf16.mxu0 0
        %765 = vmatpush1.bf16.msra.mxu0 0
        %766 = vmatprep.subr.bf16.mxu0 0
        %767 = vmatpush1.bf16.msra.mxu0 0
        %768 = vmatprep.subr.bf16.mxu0 0
        %769 = vmatpush1.bf16.msra.mxu0 0
        %770 = vmatprep.subr.bf16.mxu0 0
        %771 = vmatpush1.bf16.msra.mxu0 0
        %772 = vmatprep.mubr.bf16.mxu0 0
        %773 = vmatmul.mubr.bf16.gmra.mrb[0].mxu0 %v738
        %v774 = vpop.f32.mrb[0].mxu0
        %v775 = vadd.f32 0.0, %v774
        %v776 = vpop.f32.mrb[0].mxu0
        %v777 = vpop.f32.mrb[0].mxu0
        %v778 = vpop.f32.mrb[0].mxu0
        %779 = vdwg.mxu0
        %v780 = vld [vmem:[%s4] sm:$0xf]
        %v781 = vld [vmem:[%s4 + $0x4] sm:$0xf]
        %v782 = vld [vmem:[%s4 + $0x8] sm:$0xf]
        %v783 = vld [vmem:[%s4 + $0xc] sm:$0xf]
        %v784 = vld [vmem:[%s4 + $0x10] sm:$0xf]
        %v785 = vld [vmem:[%s4 + $0x14] sm:$0xf]
        %v786 = vld [vmem:[%s4 + $0x18] sm:$0xf]
        %v787 = vld [vmem:[%s4 + $0x1c] sm:$0xf]
        %v788 = vld [vmem:[%s4 + $0x20] sm:$0xf]
        %v789 = vld [vmem:[%s4 + $0x24] sm:$0xf]
        %v790 = vld [vmem:[%s4 + $0x28] sm:$0xf]
        %v791 = vld [vmem:[%s4 + $0x2c] sm:$0xf]
        %v792 = vld [vmem:[%s4 + $0x30] sm:$0xf]
        %v793 = vld [vmem:[%s4 + $0x34] sm:$0xf]
        %v794 = vld [vmem:[%s4 + $0x38] sm:$0xf]
        %v795 = vld [vmem:[%s4 + $0x3c] sm:$0xf]
        %v796 = vpack.c.bf16 %v775, %v775
        %v797 = vld [vmem:[%s5] sm:$0x1]
        %v799 = vlaneseq
        %v800 = vshrl.u32 %v799, 7
        %v801 = vsub.s32 0, %v800
        %v802 = vrot.slane %v797, %v801
        %v820 = vunpack.c.l.b16 %v780
        %v821 = vunpack.c.l.b16 %v781
        %v822 = vunpack.c.l.b16 %v782
        %v823 = vunpack.c.l.b16 %v783
        %v824 = vunpack.c.l.b16 %v784
        %v825 = vunpack.c.l.b16 %v785
        %v826 = vunpack.c.l.b16 %v786
        %v827 = vunpack.c.l.b16 %v787
        %v828 = vunpack.c.l.b16 %v788
        %v829 = vunpack.c.l.b16 %v789
        %v830 = vunpack.c.l.b16 %v790
        %v831 = vunpack.c.l.b16 %v791
        %v832 = vunpack.c.l.b16 %v792
        %v833 = vunpack.c.l.b16 %v793
        %v834 = vunpack.c.l.b16 %v794
        %v835 = vunpack.c.l.b16 %v795
        %v836 = vpack.c.b16 %v821, %v820
        %v837 = vpack.c.b16 %v823, %v822
        %v838 = vpack.c.b16 %v825, %v824
        %v839 = vpack.c.b16 %v827, %v826
        %v840 = vpack.c.b16 %v829, %v828
        %v841 = vpack.c.b16 %v831, %v830
        %v842 = vpack.c.b16 %v833, %v832
        %v843 = vpack.c.b16 %v835, %v834
        %852 = vmatprep.subr.bf16.mxu0 0
        %853 = vmatpush1.bf16.msra.mxu0 %v836
        %854 = vmatprep.subr.bf16.mxu0 0
        %855 = vmatpush1.bf16.msra.mxu0 %v837
        %856 = vmatprep.subr.bf16.mxu0 0
        %857 = vmatpush1.bf16.msra.mxu0 %v838
        %858 = vmatprep.subr.bf16.mxu0 0
        %859 = vmatpush1.bf16.msra.mxu0 %v839
        %860 = vmatprep.subr.bf16.mxu0 0
        %861 = vmatpush1.bf16.msra.mxu0 %v840
        %862 = vmatprep.subr.bf16.mxu0 0
        %863 = vmatpush1.bf16.msra.mxu0 %v841
        %864 = vmatprep.subr.bf16.mxu0 0
        %865 = vmatpush1.bf16.msra.mxu0 %v842
        %866 = vmatprep.subr.bf16.mxu0 0
        %867 = vmatpush1.bf16.msra.mxu0 %v843
        %868 = vmatprep.subr.bf16.mxu0 0
        %869 = vmatpush1.bf16.msra.mxu0 0
        %870 = vmatprep.subr.bf16.mxu0 0
        %871 = vmatpush1.bf16.msra.mxu0 0
        %872 = vmatprep.subr.bf16.mxu0 0
        %873 = vmatpush1.bf16.msra.mxu0 0
        %874 = vmatprep.subr.bf16.mxu0 0
        %875 = vmatpush1.bf16.msra.mxu0 0
        %876 = vmatprep.subr.bf16.mxu0 0
        %877 = vmatpush1.bf16.msra.mxu0 0
        %878 = vmatprep.subr.bf16.mxu0 0
        %879 = vmatpush1.bf16.msra.mxu0 0
        %880 = vmatprep.subr.bf16.mxu0 0
        %881 = vmatpush1.bf16.msra.mxu0 0
        %882 = vmatprep.subr.bf16.mxu0 0
        %883 = vmatpush1.bf16.msra.mxu0 0
        %884 = vmatprep.mubr.bf16.mxu0 0
        %885 = vmatmul.mubr.bf16.gmra.mrb[0].mxu0 %v796
        %v886 = vpop.f32.mrb[0].mxu0
        %v887 = vadd.f32 %v802, %v886
        %v888 = vpop.f32.mrb[0].mxu0
        %v889 = vpop.f32.mrb[0].mxu0
        %v890 = vpop.f32.mrb[0].mxu0
        %891 = vdwg.mxu0
        %v892 = vld [vmem:[#allocation4] sm:$0xff]
        %v893 = vld [vmem:[#allocation4 + $0x8] sm:$0xff]
        %v894 = vld [vmem:[#allocation4 + $0x10] sm:$0xff]
        %v895 = vld [vmem:[#allocation4 + $0x18] sm:$0xff]
        %v896 = vld [vmem:[#allocation4 + $0x20] sm:$0xff]
        %v897 = vld [vmem:[#allocation4 + $0x28] sm:$0xff]
        %v898 = vld [vmem:[#allocation4 + $0x30] sm:$0xff]
        %v899 = vld [vmem:[#allocation4 + $0x38] sm:$0xff]
        %v900 = vld [vmem:[#allocation4 + $0x40] sm:$0xff]
        %v901 = vld [vmem:[#allocation4 + $0x48] sm:$0xff]
        %v902 = vld [vmem:[#allocation4 + $0x50] sm:$0xff]
        %v903 = vld [vmem:[#allocation4 + $0x58] sm:$0xff]
        %v904 = vld [vmem:[#allocation4 + $0x60] sm:$0xff]
        %v905 = vld [vmem:[#allocation4 + $0x68] sm:$0xff]
        %v906 = vld [vmem:[#allocation4 + $0x70] sm:$0xff]
        %v907 = vld [vmem:[#allocation4 + $0x78] sm:$0xff]
        %v908 = vld [vmem:[#allocation4 + $0x80] sm:$0xff]
        %v909 = vld [vmem:[#allocation4 + $0x88] sm:$0xff]
        %v910 = vld [vmem:[#allocation4 + $0x90] sm:$0xff]
        %v911 = vld [vmem:[#allocation4 + $0x98] sm:$0xff]
        %v912 = vld [vmem:[#allocation4 + $0xa0] sm:$0xff]
        %v913 = vld [vmem:[#allocation4 + $0xa8] sm:$0xff]
        %v914 = vld [vmem:[#allocation4 + $0xb0] sm:$0xff]
        %v915 = vld [vmem:[#allocation4 + $0xb8] sm:$0xff]
        %v916 = vld [vmem:[#allocation4 + $0xc0] sm:$0xff]
        %v917 = vld [vmem:[#allocation4 + $0xc8] sm:$0xff]
        %v918 = vld [vmem:[#allocation4 + $0xd0] sm:$0xff]
        %v919 = vld [vmem:[#allocation4 + $0xd8] sm:$0xff]
        %v920 = vld [vmem:[#allocation4 + $0xe0] sm:$0xff]
        %v921 = vld [vmem:[#allocation4 + $0xe8] sm:$0xff]
        %v922 = vld [vmem:[#allocation4 + $0xf0] sm:$0xff]
        %v923 = vld [vmem:[#allocation4 + $0xf8] sm:$0xff]
        %v924 = vpack.c.bf16 %v887, %v887
        %v925 = vld [vmem:[%s7] sm:$0xf]
        %v927 = vlaneseq
        %v928 = vshrl.u32 %v927, 7
        %v929 = vsub.s32 0, %v928
        %v930 = vrot.slane %v925, %v929
        %v931 = vlaneseq
        %v932 = vshrl.u32 %v931, 7
        %v933 = vsub.s32 1, %v932
        %v934 = vrot.slane %v925, %v933
        %v935 = vlaneseq
        %v936 = vshrl.u32 %v935, 7
        %v937 = vsub.s32 2, %v936
        %v938 = vrot.slane %v925, %v937
        %v939 = vlaneseq
        %v940 = vshrl.u32 %v939, 7
        %v941 = vsub.s32 3, %v940
        %v942 = vrot.slane %v925, %v941
        %v979 = vunpack.c.l.b16 %v892
        %v980 = vunpack.c.h.b16 %v892
        %v981 = vunpack.c.l.b16 %v893
        %v982 = vunpack.c.h.b16 %v893
        %v983 = vunpack.c.l.b16 %v894
        %v984 = vunpack.c.h.b16 %v894
        %v985 = vunpack.c.l.b16 %v895
        %v986 = vunpack.c.h.b16 %v895
        %v987 = vunpack.c.l.b16 %v896
        %v988 = vunpack.c.h.b16 %v896
        %v989 = vunpack.c.l.b16 %v897
        %v990 = vunpack.c.h.b16 %v897
        %v991 = vunpack.c.l.b16 %v898
        %v992 = vunpack.c.h.b16 %v898
        %v993 = vunpack.c.l.b16 %v899
        %v994 = vunpack.c.h.b16 %v899
        %v995 = vunpack.c.l.b16 %v900
        %v996 = vunpack.c.h.b16 %v900
        %v997 = vunpack.c.l.b16 %v901
        %v998 = vunpack.c.h.b16 %v901
        %v999 = vunpack.c.l.b16 %v902
        %v1000 = vunpack.c.h.b16 %v902
        %v1001 = vunpack.c.l.b16 %v903
        %v1002 = vunpack.c.h.b16 %v903
        %v1003 = vunpack.c.l.b16 %v904
        %v1004 = vunpack.c.h.b16 %v904
        %v1005 = vunpack.c.l.b16 %v905
        %v1006 = vunpack.c.h.b16 %v905
        %v1007 = vunpack.c.l.b16 %v906
        %v1008 = vunpack.c.h.b16 %v906
        %v1009 = vunpack.c.l.b16 %v907
        %v1010 = vunpack.c.h.b16 %v907
        %v1011 = vunpack.c.l.b16 %v908
        %v1012 = vunpack.c.h.b16 %v908
        %v1013 = vunpack.c.l.b16 %v909
        %v1014 = vunpack.c.h.b16 %v909
        %v1015 = vunpack.c.l.b16 %v910
        %v1016 = vunpack.c.h.b16 %v910
        %v1017 = vunpack.c.l.b16 %v911
        %v1018 = vunpack.c.h.b16 %v911
        %v1019 = vunpack.c.l.b16 %v912
        %v1020 = vunpack.c.h.b16 %v912
        %v1021 = vunpack.c.l.b16 %v913
        %v1022 = vunpack.c.h.b16 %v913
        %v1023 = vunpack.c.l.b16 %v914
        %v1024 = vunpack.c.h.b16 %v914
        %v1025 = vunpack.c.l.b16 %v915
        %v1026 = vunpack.c.h.b16 %v915
        %v1027 = vunpack.c.l.b16 %v916
        %v1028 = vunpack.c.h.b16 %v916
        %v1029 = vunpack.c.l.b16 %v917
        %v1030 = vunpack.c.h.b16 %v917
        %v1031 = vunpack.c.l.b16 %v918
        %v1032 = vunpack.c.h.b16 %v918
        %v1033 = vunpack.c.l.b16 %v919
        %v1034 = vunpack.c.h.b16 %v919
        %v1035 = vunpack.c.l.b16 %v920
        %v1036 = vunpack.c.h.b16 %v920
        %v1037 = vunpack.c.l.b16 %v921
        %v1038 = vunpack.c.h.b16 %v921
        %v1039 = vunpack.c.l.b16 %v922
        %v1040 = vunpack.c.h.b16 %v922
        %v1041 = vunpack.c.l.b16 %v923
        %v1042 = vunpack.c.h.b16 %v923
        %v1043 = vpack.c.b16 %v983, %v979
        %v1044 = vpack.c.b16 %v984, %v980
        %v1045 = vpack.c.b16 %v985, %v981
        %v1046 = vpack.c.b16 %v986, %v982
        %v1047 = vpack.c.b16 %v991, %v987
        %v1048 = vpack.c.b16 %v992, %v988
        %v1049 = vpack.c.b16 %v993, %v989
        %v1050 = vpack.c.b16 %v994, %v990
        %v1051 = vpack.c.b16 %v999, %v995
        %v1052 = vpack.c.b16 %v1000, %v996
        %v1053 = vpack.c.b16 %v1001, %v997
        %v1054 = vpack.c.b16 %v1002, %v998
        %v1055 = vpack.c.b16 %v1007, %v1003
        %v1056 = vpack.c.b16 %v1008, %v1004
        %v1057 = vpack.c.b16 %v1009, %v1005
        %v1058 = vpack.c.b16 %v1010, %v1006
        %v1059 = vpack.c.b16 %v1015, %v1011
        %v1060 = vpack.c.b16 %v1016, %v1012
        %v1061 = vpack.c.b16 %v1017, %v1013
        %v1062 = vpack.c.b16 %v1018, %v1014
        %v1063 = vpack.c.b16 %v1023, %v1019
        %v1064 = vpack.c.b16 %v1024, %v1020
        %v1065 = vpack.c.b16 %v1025, %v1021
        %v1066 = vpack.c.b16 %v1026, %v1022
        %v1067 = vpack.c.b16 %v1031, %v1027
        %v1068 = vpack.c.b16 %v1032, %v1028
        %v1069 = vpack.c.b16 %v1033, %v1029
        %v1070 = vpack.c.b16 %v1034, %v1030
        %v1071 = vpack.c.b16 %v1039, %v1035
        %v1072 = vpack.c.b16 %v1040, %v1036
        %v1073 = vpack.c.b16 %v1041, %v1037
        %v1074 = vpack.c.b16 %v1042, %v1038
        %1107 = vmatprep.subr.bf16.mxu0 %v1044
        %1108 = vmatpush1.bf16.msra.mxu0 %v1043
        %1109 = vmatprep.subr.bf16.mxu0 %v1048
        %1110 = vmatpush1.bf16.msra.mxu0 %v1047
        %1111 = vmatprep.subr.bf16.mxu0 %v1052
        %1112 = vmatpush1.bf16.msra.mxu0 %v1051
        %1113 = vmatprep.subr.bf16.mxu0 %v1056
        %1114 = vmatpush1.bf16.msra.mxu0 %v1055
        %1115 = vmatprep.subr.bf16.mxu0 %v1060
        %1116 = vmatpush1.bf16.msra.mxu0 %v1059
        %1117 = vmatprep.subr.bf16.mxu0 %v1064
        %1118 = vmatpush1.bf16.msra.mxu0 %v1063
        %1119 = vmatprep.subr.bf16.mxu0 %v1068
        %1120 = vmatpush1.bf16.msra.mxu0 %v1067
        %1121 = vmatprep.subr.bf16.mxu0 %v1072
        %1122 = vmatpush1.bf16.msra.mxu0 %v1071
        %1123 = vmatprep.subr.bf16.mxu0 0
        %1124 = vmatpush1.bf16.msra.mxu0 0
        %1125 = vmatprep.subr.bf16.mxu0 0
        %1126 = vmatpush1.bf16.msra.mxu0 0
        %1127 = vmatprep.subr.bf16.mxu0 0
        %1128 = vmatpush1.bf16.msra.mxu0 0
        %1129 = vmatprep.subr.bf16.mxu0 0
        %1130 = vmatpush1.bf16.msra.mxu0 0
        %1131 = vmatprep.subr.bf16.mxu0 0
        %1132 = vmatpush1.bf16.msra.mxu0 0
        %1133 = vmatprep.subr.bf16.mxu0 0
        %1134 = vmatpush1.bf16.msra.mxu0 0
        %1135 = vmatprep.subr.bf16.mxu0 0
        %1136 = vmatpush1.bf16.msra.mxu0 0
        %1137 = vmatprep.subr.bf16.mxu0 0
        %1138 = vmatpush1.bf16.msra.mxu0 0
        %1139 = vmatprep.mubr.bf16.mxu0 0
        %1140 = vmatmul.mubr.bf16.gmra.mrb[0].mxu0 %v924
        %v1141 = vpop.f32.mrb[0].mxu0
        %v1142 = vadd.f32 %v930, %v1141
        %v1143 = vpop.f32.mrb[0].mxu0
        %v1144 = vadd.f32 %v934, %v1143
        %v1145 = vpop.f32.mrb[0].mxu0
        %v1146 = vpop.f32.mrb[0].mxu0
        %1147 = vdwg.mxu0
        %1148 = vmatprep.subr.bf16.mxu0 %v1046
        %1149 = vmatpush1.bf16.msra.mxu0 %v1045
        %1150 = vmatprep.subr.bf16.mxu0 %v1050
        %1151 = vmatpush1.bf16.msra.mxu0 %v1049
        %1152 = vmatprep.subr.bf16.mxu0 %v1054
        %1153 = vmatpush1.bf16.msra.mxu0 %v1053
        %1154 = vmatprep.subr.bf16.mxu0 %v1058
        %1155 = vmatpush1.bf16.msra.mxu0 %v1057
        %1156 = vmatprep.subr.bf16.mxu0 %v1062
        %1157 = vmatpush1.bf16.msra.mxu0 %v1061
        %1158 = vmatprep.subr.bf16.mxu0 %v1066
        %1159 = vmatpush1.bf16.msra.mxu0 %v1065
        %1160 = vmatprep.subr.bf16.mxu0 %v1070
        %1161 = vmatpush1.bf16.msra.mxu0 %v1069
        %1162 = vmatprep.subr.bf16.mxu0 %v1074
        %1163 = vmatpush1.bf16.msra.mxu0 %v1073
        %1164 = vmatprep.subr.bf16.mxu0 0
        %1165 = vmatpush1.bf16.msra.mxu0 0
        %1166 = vmatprep.subr.bf16.mxu0 0
        %1167 = vmatpush1.bf16.msra.mxu0 0
        %1168 = vmatprep.subr.bf16.mxu0 0
        %1169 = vmatpush1.bf16.msra.mxu0 0
        %1170 = vmatprep.subr.bf16.mxu0 0
        %1171 = vmatpush1.bf16.msra.mxu0 0
        %1172 = vmatprep.subr.bf16.mxu0 0
        %1173 = vmatpush1.bf16.msra.mxu0 0
        %1174 = vmatprep.subr.bf16.mxu0 0
        %1175 = vmatpush1.bf16.msra.mxu0 0
        %1176 = vmatprep.subr.bf16.mxu0 0
        %1177 = vmatpush1.bf16.msra.mxu0 0
        %1178 = vmatprep.subr.bf16.mxu0 0
        %1179 = vmatpush1.bf16.msra.mxu0 0
        %1180 = vmatprep.mubr.bf16.mxu0 0
        %1181 = vmatmul.mubr.bf16.gmra.mrb[0].mxu0 %v924
        %v1182 = vpop.f32.mrb[0].mxu0
        %v1183 = vadd.f32 %v938, %v1182
        %v1184 = vpop.f32.mrb[0].mxu0
        %v1185 = vadd.f32 %v942, %v1184
        %v1186 = vpop.f32.mrb[0].mxu0
        %v1187 = vpop.f32.mrb[0].mxu0
        %1188 = vdwg.mxu0
        %v1189 = vmul.f32 %v1142, 0.5
        %v1190 = vmul.f32 %v1144, 0.5
        %v1191 = vmul.f32 %v1183, 0.5
        %v1192 = vmul.f32 %v1185, 0.5
        %v1193 = vmul.f32 %v1142, 0.044715
        %v1194 = vmul.f32 %v1144, 0.044715
        %v1195 = vmul.f32 %v1183, 0.044715
        %v1196 = vmul.f32 %v1185, 0.044715
        %v1197 = vmul.f32 %v1193, %v1142
        %v1198 = vmul.f32 %v1194, %v1144
        %v1199 = vmul.f32 %v1195, %v1183
        %v1200 = vmul.f32 %v1196, %v1185
        %v1201 = vmul.f32 %v1197, %v1142
        %v1202 = vmul.f32 %v1198, %v1144
        %v1203 = vmul.f32 %v1199, %v1183
        %v1204 = vmul.f32 %v1200, %v1185
        %v1205 = vadd.f32 %v1142, %v1201
        %v1206 = vadd.f32 %v1144, %v1202
        %v1207 = vadd.f32 %v1183, %v1203
        %v1208 = vadd.f32 %v1185, %v1204
        %v1209 = vmul.f32 %v1205, 0.7978846
        %v1210 = vmul.f32 %v1206, 0.7978846
        %v1211 = vmul.f32 %v1207, 0.7978846
        %v1212 = vmul.f32 %v1208, 0.7978846
        %v1213 = vtanh.pop %v1209
        %v1214 = vtanh.pop %v1210
        %v1215 = vtanh.pop %v1211
        %v1216 = vtanh.pop %v1212
        %v1217 = vadd.f32 %v1213, 1.0
        %v1218 = vadd.f32 %v1214, 1.0
        %v1219 = vadd.f32 %v1215, 1.0
        %v1220 = vadd.f32 %v1216, 1.0
        %v1221 = vmul.f32 %v1189, %v1217
        %v1222 = vmul.f32 %v1190, %v1218
        %v1223 = vmul.f32 %v1191, %v1219
        %v1224 = vmul.f32 %v1192, %v1220
        %v1225 = vld [vmem:[#allocation6] sm:$0xf]
        %v1226 = vld [vmem:[#allocation6 + $0x4] sm:$0xf]
        %v1227 = vld [vmem:[#allocation6 + $0x8] sm:$0xf]
        %v1228 = vld [vmem:[#allocation6 + $0xc] sm:$0xf]
        %v1229 = vld [vmem:[#allocation6 + $0x10] sm:$0xf]
        %v1230 = vld [vmem:[#allocation6 + $0x14] sm:$0xf]
        %v1231 = vld [vmem:[#allocation6 + $0x18] sm:$0xf]
        %v1232 = vld [vmem:[#allocation6 + $0x1c] sm:$0xf]
        %v1233 = vld [vmem:[#allocation6 + $0x20] sm:$0xf]
        %v1234 = vld [vmem:[#allocation6 + $0x24] sm:$0xf]
        %v1235 = vld [vmem:[#allocation6 + $0x28] sm:$0xf]
        %v1236 = vld [vmem:[#allocation6 + $0x2c] sm:$0xf]
        %v1237 = vld [vmem:[#allocation6 + $0x30] sm:$0xf]
        %v1238 = vld [vmem:[#allocation6 + $0x34] sm:$0xf]
        %v1239 = vld [vmem:[#allocation6 + $0x38] sm:$0xf]
        %v1240 = vld [vmem:[#allocation6 + $0x3c] sm:$0xf]
        %v1241 = vld [vmem:[#allocation6 + $0x40] sm:$0xf]
        %v1242 = vld [vmem:[#allocation6 + $0x44] sm:$0xf]
        %v1243 = vld [vmem:[#allocation6 + $0x48] sm:$0xf]
        %v1244 = vld [vmem:[#allocation6 + $0x4c] sm:$0xf]
        %v1245 = vld [vmem:[#allocation6 + $0x50] sm:$0xf]
        %v1246 = vld [vmem:[#allocation6 + $0x54] sm:$0xf]
        %v1247 = vld [vmem:[#allocation6 + $0x58] sm:$0xf]
        %v1248 = vld [vmem:[#allocation6 + $0x5c] sm:$0xf]
        %v1249 = vld [vmem:[#allocation6 + $0x60] sm:$0xf]
        %v1250 = vld [vmem:[#allocation6 + $0x64] sm:$0xf]
        %v1251 = vld [vmem:[#allocation6 + $0x68] sm:$0xf]
        %v1252 = vld [vmem:[#allocation6 + $0x6c] sm:$0xf]
        %v1253 = vld [vmem:[#allocation6 + $0x70] sm:$0xf]
        %v1254 = vld [vmem:[#allocation6 + $0x74] sm:$0xf]
        %v1255 = vld [vmem:[#allocation6 + $0x78] sm:$0xf]
        %v1256 = vld [vmem:[#allocation6 + $0x7c] sm:$0xf]
        %v1257 = vld [vmem:[#allocation6 + $0x80] sm:$0xf]
        %v1258 = vld [vmem:[#allocation6 + $0x84] sm:$0xf]
        %v1259 = vld [vmem:[#allocation6 + $0x88] sm:$0xf]
        %v1260 = vld [vmem:[#allocation6 + $0x8c] sm:$0xf]
        %v1261 = vld [vmem:[#allocation6 + $0x90] sm:$0xf]
        %v1262 = vld [vmem:[#allocation6 + $0x94] sm:$0xf]
        %v1263 = vld [vmem:[#allocation6 + $0x98] sm:$0xf]
        %v1264 = vld [vmem:[#allocation6 + $0x9c] sm:$0xf]
        %v1265 = vld [vmem:[#allocation6 + $0xa0] sm:$0xf]
        %v1266 = vld [vmem:[#allocation6 + $0xa4] sm:$0xf]
        %v1267 = vld [vmem:[#allocation6 + $0xa8] sm:$0xf]
        %v1268 = vld [vmem:[#allocation6 + $0xac] sm:$0xf]
        %v1269 = vld [vmem:[#allocation6 + $0xb0] sm:$0xf]
        %v1270 = vld [vmem:[#allocation6 + $0xb4] sm:$0xf]
        %v1271 = vld [vmem:[#allocation6 + $0xb8] sm:$0xf]
        %v1272 = vld [vmem:[#allocation6 + $0xbc] sm:$0xf]
        %v1273 = vld [vmem:[#allocation6 + $0xc0] sm:$0xf]
        %v1274 = vld [vmem:[#allocation6 + $0xc4] sm:$0xf]
        %v1275 = vld [vmem:[#allocation6 + $0xc8] sm:$0xf]
        %v1276 = vld [vmem:[#allocation6 + $0xcc] sm:$0xf]
        %v1277 = vld [vmem:[#allocation6 + $0xd0] sm:$0xf]
        %v1278 = vld [vmem:[#allocation6 + $0xd4] sm:$0xf]
        %v1279 = vld [vmem:[#allocation6 + $0xd8] sm:$0xf]
        %v1280 = vld [vmem:[#allocation6 + $0xdc] sm:$0xf]
        %v1281 = vld [vmem:[#allocation6 + $0xe0] sm:$0xf]
        %v1282 = vld [vmem:[#allocation6 + $0xe4] sm:$0xf]
        %v1283 = vld [vmem:[#allocation6 + $0xe8] sm:$0xf]
        %v1284 = vld [vmem:[#allocation6 + $0xec] sm:$0xf]
        %v1285 = vld [vmem:[#allocation6 + $0xf0] sm:$0xf]
        %v1286 = vld [vmem:[#allocation6 + $0xf4] sm:$0xf]
        %v1287 = vld [vmem:[#allocation6 + $0xf8] sm:$0xf]
        %v1288 = vld [vmem:[#allocation6 + $0xfc] sm:$0xf]
        %v1289 = vpack.c.bf16 %v1221, %v1221
        %v1290 = vpack.c.bf16 %v1222, %v1222
        %v1291 = vpack.c.bf16 %v1223, %v1223
        %v1292 = vpack.c.bf16 %v1224, %v1224
        %v1293 = vld [vmem:[%s9] sm:$0x1]
        %v1295 = vlaneseq
        %v1296 = vshrl.u32 %v1295, 7
        %v1297 = vsub.s32 0, %v1296
        %v1298 = vrot.slane %v1293, %v1297
        %v1364 = vunpack.c.l.b16 %v1225
        %v1365 = vunpack.c.l.b16 %v1226
        %v1366 = vunpack.c.l.b16 %v1227
        %v1367 = vunpack.c.l.b16 %v1228
        %v1368 = vunpack.c.l.b16 %v1229
        %v1369 = vunpack.c.l.b16 %v1230
        %v1370 = vunpack.c.l.b16 %v1231
        %v1371 = vunpack.c.l.b16 %v1232
        %v1372 = vunpack.c.l.b16 %v1233
        %v1373 = vunpack.c.l.b16 %v1234
        %v1374 = vunpack.c.l.b16 %v1235
        %v1375 = vunpack.c.l.b16 %v1236
        %v1376 = vunpack.c.l.b16 %v1237
        %v1377 = vunpack.c.l.b16 %v1238
        %v1378 = vunpack.c.l.b16 %v1239
        %v1379 = vunpack.c.l.b16 %v1240
        %v1380 = vunpack.c.l.b16 %v1241
        %v1381 = vunpack.c.l.b16 %v1242
        %v1382 = vunpack.c.l.b16 %v1243
        %v1383 = vunpack.c.l.b16 %v1244
        %v1384 = vunpack.c.l.b16 %v1245
        %v1385 = vunpack.c.l.b16 %v1246
        %v1386 = vunpack.c.l.b16 %v1247
        %v1387 = vunpack.c.l.b16 %v1248
        %v1388 = vunpack.c.l.b16 %v1249
        %v1389 = vunpack.c.l.b16 %v1250
        %v1390 = vunpack.c.l.b16 %v1251
        %v1391 = vunpack.c.l.b16 %v1252
        %v1392 = vunpack.c.l.b16 %v1253
        %v1393 = vunpack.c.l.b16 %v1254
        %v1394 = vunpack.c.l.b16 %v1255
        %v1395 = vunpack.c.l.b16 %v1256
        %v1396 = vunpack.c.l.b16 %v1257
        %v1397 = vunpack.c.l.b16 %v1258
        %v1398 = vunpack.c.l.b16 %v1259
        %v1399 = vunpack.c.l.b16 %v1260
        %v1400 = vunpack.c.l.b16 %v1261
        %v1401 = vunpack.c.l.b16 %v1262
        %v1402 = vunpack.c.l.b16 %v1263
        %v1403 = vunpack.c.l.b16 %v1264
        %v1404 = vunpack.c.l.b16 %v1265
        %v1405 = vunpack.c.l.b16 %v1266
        %v1406 = vunpack.c.l.b16 %v1267
        %v1407 = vunpack.c.l.b16 %v1268
        %v1408 = vunpack.c.l.b16 %v1269
        %v1409 = vunpack.c.l.b16 %v1270
        %v1410 = vunpack.c.l.b16 %v1271
        %v1411 = vunpack.c.l.b16 %v1272
        %v1412 = vunpack.c.l.b16 %v1273
        %v1413 = vunpack.c.l.b16 %v1274
        %v1414 = vunpack.c.l.b16 %v1275
        %v1415 = vunpack.c.l.b16 %v1276
        %v1416 = vunpack.c.l.b16 %v1277
        %v1417 = vunpack.c.l.b16 %v1278
        %v1418 = vunpack.c.l.b16 %v1279
        %v1419 = vunpack.c.l.b16 %v1280
        %v1420 = vunpack.c.l.b16 %v1281
        %v1421 = vunpack.c.l.b16 %v1282
        %v1422 = vunpack.c.l.b16 %v1283
        %v1423 = vunpack.c.l.b16 %v1284
        %v1424 = vunpack.c.l.b16 %v1285
        %v1425 = vunpack.c.l.b16 %v1286
        %v1426 = vunpack.c.l.b16 %v1287
        %v1427 = vunpack.c.l.b16 %v1288
        %v1428 = vpack.c.b16 %v1365, %v1364
        %v1429 = vpack.c.b16 %v1367, %v1366
        %v1430 = vpack.c.b16 %v1369, %v1368
        %v1431 = vpack.c.b16 %v1371, %v1370
        %v1432 = vpack.c.b16 %v1373, %v1372
        %v1433 = vpack.c.b16 %v1375, %v1374
        %v1434 = vpack.c.b16 %v1377, %v1376
        %v1435 = vpack.c.b16 %v1379, %v1378
        %v1436 = vpack.c.b16 %v1381, %v1380
        %v1437 = vpack.c.b16 %v1383, %v1382
        %v1438 = vpack.c.b16 %v1385, %v1384
        %v1439 = vpack.c.b16 %v1387, %v1386
        %v1440 = vpack.c.b16 %v1389, %v1388
        %v1441 = vpack.c.b16 %v1391, %v1390
        %v1442 = vpack.c.b16 %v1393, %v1392
        %v1443 = vpack.c.b16 %v1395, %v1394
        %v1444 = vpack.c.b16 %v1397, %v1396
        %v1445 = vpack.c.b16 %v1399, %v1398
        %v1446 = vpack.c.b16 %v1401, %v1400
        %v1447 = vpack.c.b16 %v1403, %v1402
        %v1448 = vpack.c.b16 %v1405, %v1404
        %v1449 = vpack.c.b16 %v1407, %v1406
        %v1450 = vpack.c.b16 %v1409, %v1408
        %v1451 = vpack.c.b16 %v1411, %v1410
        %v1452 = vpack.c.b16 %v1413, %v1412
        %v1453 = vpack.c.b16 %v1415, %v1414
        %v1454 = vpack.c.b16 %v1417, %v1416
        %v1455 = vpack.c.b16 %v1419, %v1418
        %v1456 = vpack.c.b16 %v1421, %v1420
        %v1457 = vpack.c.b16 %v1423, %v1422
        %v1458 = vpack.c.b16 %v1425, %v1424
        %v1459 = vpack.c.b16 %v1427, %v1426
        %1492 = vmatprep.subr.bf16.mxu0 0
        %1493 = vmatpush1.bf16.msra.mxu0 %v1428
        %1494 = vmatprep.subr.bf16.mxu0 0
        %1495 = vmatpush1.bf16.msra.mxu0 %v1429
        %1496 = vmatprep.subr.bf16.mxu0 0
        %1497 = vmatpush1.bf16.msra.mxu0 %v1430
        %1498 = vmatprep.subr.bf16.mxu0 0
        %1499 = vmatpush1.bf16.msra.mxu0 %v1431
        %1500 = vmatprep.subr.bf16.mxu0 0
        %1501 = vmatpush1.bf16.msra.mxu0 %v1432
        %1502 = vmatprep.subr.bf16.mxu0 0
        %1503 = vmatpush1.bf16.msra.mxu0 %v1433
        %1504 = vmatprep.subr.bf16.mxu0 0
        %1505 = vmatpush1.bf16.msra.mxu0 %v1434
        %1506 = vmatprep.subr.bf16.mxu0 0
        %1507 = vmatpush1.bf16.msra.mxu0 %v1435
        %1508 = vmatprep.subr.bf16.mxu0 0
        %1509 = vmatpush1.bf16.msra.mxu0 %v1436
        %1510 = vmatprep.subr.bf16.mxu0 0
        %1511 = vmatpush1.bf16.msra.mxu0 %v1437
        %1512 = vmatprep.subr.bf16.mxu0 0
        %1513 = vmatpush1.bf16.msra.mxu0 %v1438
        %1514 = vmatprep.subr.bf16.mxu0 0
        %1515 = vmatpush1.bf16.msra.mxu0 %v1439
        %1516 = vmatprep.subr.bf16.mxu0 0
        %1517 = vmatpush1.bf16.msra.mxu0 %v1440
        %1518 = vmatprep.subr.bf16.mxu0 0
        %1519 = vmatpush1.bf16.msra.mxu0 %v1441
        %1520 = vmatprep.subr.bf16.mxu0 0
        %1521 = vmatpush1.bf16.msra.mxu0 %v1442
        %1522 = vmatprep.subr.bf16.mxu0 0
        %1523 = vmatpush1.bf16.msra.mxu0 %v1443
        %1524 = vmatprep.mubr.bf16.mxu0 %v1290
        %1525 = vmatmul.mubr.bf16.gmra.mrb[0].mxu0 %v1289
        %v1526 = vpop.f32.mrb[0].mxu0
        %v1527 = vadd.f32 %v1298, %v1526
        %v1528 = vpop.f32.mrb[0].mxu0
        %v1529 = vpop.f32.mrb[0].mxu0
        %v1530 = vpop.f32.mrb[0].mxu0
        %1531 = vdwg.mxu0
        %1532 = vmatprep.subr.bf16.mxu0 0
        %1533 = vmatpush1.bf16.msra.mxu0 %v1444
        %1534 = vmatprep.subr.bf16.mxu0 0
        %1535 = vmatpush1.bf16.msra.mxu0 %v1445
        %1536 = vmatprep.subr.bf16.mxu0 0
        %1537 = vmatpush1.bf16.msra.mxu0 %v1446
        %1538 = vmatprep.subr.bf16.mxu0 0
        %1539 = vmatpush1.bf16.msra.mxu0 %v1447
        %1540 = vmatprep.subr.bf16.mxu0 0
        %1541 = vmatpush1.bf16.msra.mxu0 %v1448
        %1542 = vmatprep.subr.bf16.mxu0 0
        %1543 = vmatpush1.bf16.msra.mxu0 %v1449
        %1544 = vmatprep.subr.bf16.mxu0 0
        %1545 = vmatpush1.bf16.msra.mxu0 %v1450
        %1546 = vmatprep.subr.bf16.mxu0 0
        %1547 = vmatpush1.bf16.msra.mxu0 %v1451
        %1548 = vmatprep.subr.bf16.mxu0 0
        %1549 = vmatpush1.bf16.msra.mxu0 %v1452
        %1550 = vmatprep.subr.bf16.mxu0 0
        %1551 = vmatpush1.bf16.msra.mxu0 %v1453
        %1552 = vmatprep.subr.bf16.mxu0 0
        %1553 = vmatpush1.bf16.msra.mxu0 %v1454
        %1554 = vmatprep.subr.bf16.mxu0 0
        %1555 = vmatpush1.bf16.msra.mxu0 %v1455
        %1556 = vmatprep.subr.bf16.mxu0 0
        %1557 = vmatpush1.bf16.msra.mxu0 %v1456
        %1558 = vmatprep.subr.bf16.mxu0 0
        %1559 = vmatpush1.bf16.msra.mxu0 %v1457
        %1560 = vmatprep.subr.bf16.mxu0 0
        %1561 = vmatpush1.bf16.msra.mxu0 %v1458
        %1562 = vmatprep.subr.bf16.mxu0 0
        %1563 = vmatpush1.bf16.msra.mxu0 %v1459
        %1564 = vmatprep.mubr.bf16.mxu0 %v1292
        %1565 = vmatmul.mubr.bf16.gmra.mrb[0].mxu0 %v1291
        %v1566 = vpop.f32.mrb[0].mxu0
        %v1567 = vadd.f32 %v1527, %v1566
        %v1568 = vpop.f32.mrb[0].mxu0
        %v1569 = vpop.f32.mrb[0].mxu0
        %v1570 = vpop.f32.mrb[0].mxu0
        %1571 = vdwg.mxu0
        %v1572 = vpack.c.bf16 %v1567, %v1567
        %1573 = vmatprep.subr.bf16.mxu0 %v1044
        %1574 = vmatpush1.bf16.msra.mxu0 %v1043
        %1575 = vmatprep.subr.bf16.mxu0 %v1048
        %1576 = vmatpush1.bf16.msra.mxu0 %v1047
        %1577 = vmatprep.subr.bf16.mxu0 %v1052
        %1578 = vmatpush1.bf16.msra.mxu0 %v1051
        %1579 = vmatprep.subr.bf16.mxu0 %v1056
        %1580 = vmatpush1.bf16.msra.mxu0 %v1055
        %1581 = vmatprep.subr.bf16.mxu0 %v1060
        %1582 = vmatpush1.bf16.msra.mxu0 %v1059
        %1583 = vmatprep.subr.bf16.mxu0 %v1064
        %1584 = vmatpush1.bf16.msra.mxu0 %v1063
        %1585 = vmatprep.subr.bf16.mxu0 %v1068
        %1586 = vmatpush1.bf16.msra.mxu0 %v1067
        %1587 = vmatprep.subr.bf16.mxu0 %v1072
        %1588 = vmatpush1.bf16.msra.mxu0 %v1071
        %1589 = vmatprep.subr.bf16.mxu0 0
        %1590 = vmatpush1.bf16.msra.mxu0 0
        %1591 = vmatprep.subr.bf16.mxu0 0
        %1592 = vmatpush1.bf16.msra.mxu0 0
        %1593 = vmatprep.subr.bf16.mxu0 0
        %1594 = vmatpush1.bf16.msra.mxu0 0
        %1595 = vmatprep.subr.bf16.mxu0 0
        %1596 = vmatpush1.bf16.msra.mxu0 0
        %1597 = vmatprep.subr.bf16.mxu0 0
        %1598 = vmatpush1.bf16.msra.mxu0 0
        %1599 = vmatprep.subr.bf16.mxu0 0
        %1600 = vmatpush1.bf16.msra.mxu0 0
        %1601 = vmatprep.subr.bf16.mxu0 0
        %1602 = vmatpush1.bf16.msra.mxu0 0
        %1603 = vmatprep.subr.bf16.mxu0 0
        %1604 = vmatpush1.bf16.msra.mxu0 0
        %1605 = vmatprep.mubr.bf16.mxu0 0
        %1606 = vmatmul.mubr.bf16.gmra.mrb[0].mxu0 %v1572
        %v1607 = vpop.f32.mrb[0].mxu0
        %v1608 = vadd.f32 %v930, %v1607
        %v1609 = vpop.f32.mrb[0].mxu0
        %v1610 = vadd.f32 %v934, %v1609
        %v1611 = vpop.f32.mrb[0].mxu0
        %v1612 = vpop.f32.mrb[0].mxu0
        %1613 = vdwg.mxu0
        %1614 = vmatprep.subr.bf16.mxu0 %v1046
        %1615 = vmatpush1.bf16.msra.mxu0 %v1045
        %1616 = vmatprep.subr.bf16.mxu0 %v1050
        %1617 = vmatpush1.bf16.msra.mxu0 %v1049
        %1618 = vmatprep.subr.bf16.mxu0 %v1054
        %1619 = vmatpush1.bf16.msra.mxu0 %v1053
        %1620 = vmatprep.subr.bf16.mxu0 %v1058
        %1621 = vmatpush1.bf16.msra.mxu0 %v1057
        %1622 = vmatprep.subr.bf16.mxu0 %v1062
        %1623 = vmatpush1.bf16.msra.mxu0 %v1061
        %1624 = vmatprep.subr.bf16.mxu0 %v1066
        %1625 = vmatpush1.bf16.msra.mxu0 %v1065
        %1626 = vmatprep.subr.bf16.mxu0 %v1070
        %1627 = vmatpush1.bf16.msra.mxu0 %v1069
        %1628 = vmatprep.subr.bf16.mxu0 %v1074
        %1629 = vmatpush1.bf16.msra.mxu0 %v1073
        %1630 = vmatprep.subr.bf16.mxu0 0
        %1631 = vmatpush1.bf16.msra.mxu0 0
        %1632 = vmatprep.subr.bf16.mxu0 0
        %1633 = vmatpush1.bf16.msra.mxu0 0
        %1634 = vmatprep.subr.bf16.mxu0 0
        %1635 = vmatpush1.bf16.msra.mxu0 0
        %1636 = vmatprep.subr.bf16.mxu0 0
        %1637 = vmatpush1.bf16.msra.mxu0 0
        %1638 = vmatprep.subr.bf16.mxu0 0
        %1639 = vmatpush1.bf16.msra.mxu0 0
        %1640 = vmatprep.subr.bf16.mxu0 0
        %1641 = vmatpush1.bf16.msra.mxu0 0
        %1642 = vmatprep.subr.bf16.mxu0 0
        %1643 = vmatpush1.bf16.msra.mxu0 0
        %1644 = vmatprep.subr.bf16.mxu0 0
        %1645 = vmatpush1.bf16.msra.mxu0 0
        %1646 = vmatprep.mubr.bf16.mxu0 0
        %1647 = vmatmul.mubr.bf16.gmra.mrb[0].mxu0 %v1572
        %v1648 = vpop.f32.mrb[0].mxu0
        %v1649 = vadd.f32 %v938, %v1648
        %v1650 = vpop.f32.mrb[0].mxu0
        %v1651 = vadd.f32 %v942, %v1650
        %v1652 = vpop.f32.mrb[0].mxu0
        %v1653 = vpop.f32.mrb[0].mxu0
        %1654 = vdwg.mxu0
        %v1655 = vmul.f32 %v1608, 0.5
        %v1656 = vmul.f32 %v1610, 0.5
        %v1657 = vmul.f32 %v1649, 0.5
        %v1658 = vmul.f32 %v1651, 0.5
        %v1659 = vmul.f32 %v1608, 0.044715
        %v1660 = vmul.f32 %v1610, 0.044715
        %v1661 = vmul.f32 %v1649, 0.044715
        %v1662 = vmul.f32 %v1651, 0.044715
        %v1663 = vmul.f32 %v1659, %v1608
        %v1664 = vmul.f32 %v1660, %v1610
        %v1665 = vmul.f32 %v1661, %v1649
        %v1666 = vmul.f32 %v1662, %v1651
        %v1667 = vmul.f32 %v1663, %v1608
        %v1668 = vmul.f32 %v1664, %v1610
        %v1669 = vmul.f32 %v1665, %v1649
        %v1670 = vmul.f32 %v1666, %v1651
        %v1671 = vadd.f32 %v1608, %v1667
        %v1672 = vadd.f32 %v1610, %v1668
        %v1673 = vadd.f32 %v1649, %v1669
        %v1674 = vadd.f32 %v1651, %v1670
        %v1675 = vmul.f32 %v1671, 0.7978846
        %v1676 = vmul.f32 %v1672, 0.7978846
        %v1677 = vmul.f32 %v1673, 0.7978846
        %v1678 = vmul.f32 %v1674, 0.7978846
        %v1679 = vtanh.pop %v1675
        %v1680 = vtanh.pop %v1676
        %v1681 = vtanh.pop %v1677
        %v1682 = vtanh.pop %v1678
        %v1683 = vadd.f32 %v1679, 1.0
        %v1684 = vadd.f32 %v1680, 1.0
        %v1685 = vadd.f32 %v1681, 1.0
        %v1686 = vadd.f32 %v1682, 1.0
        %v1687 = vmul.f32 %v1655, %v1683
        %v1688 = vmul.f32 %v1656, %v1684
        %v1689 = vmul.f32 %v1657, %v1685
        %v1690 = vmul.f32 %v1658, %v1686
        %v1691 = vpack.c.bf16 %v1687, %v1687
        %v1692 = vpack.c.bf16 %v1688, %v1688
        %v1693 = vpack.c.bf16 %v1689, %v1689
        %v1694 = vpack.c.bf16 %v1690, %v1690
        %1695 = vmatprep.subr.bf16.mxu0 0
        %1696 = vmatpush1.bf16.msra.mxu0 %v1428
        %1697 = vmatprep.subr.bf16.mxu0 0
        %1698 = vmatpush1.bf16.msra.mxu0 %v1429
        %1699 = vmatprep.subr.bf16.mxu0 0
        %1700 = vmatpush1.bf16.msra.mxu0 %v1430
        %1701 = vmatprep.subr.bf16.mxu0 0
        %1702 = vmatpush1.bf16.msra.mxu0 %v1431
        %1703 = vmatprep.subr.bf16.mxu0 0
        %1704 = vmatpush1.bf16.msra.mxu0 %v1432
        %1705 = vmatprep.subr.bf16.mxu0 0
        %1706 = vmatpush1.bf16.msra.mxu0 %v1433
        %1707 = vmatprep.subr.bf16.mxu0 0
        %1708 = vmatpush1.bf16.msra.mxu0 %v1434
        %1709 = vmatprep.subr.bf16.mxu0 0
        %1710 = vmatpush1.bf16.msra.mxu0 %v1435
        %1711 = vmatprep.subr.bf16.mxu0 0
        %1712 = vmatpush1.bf16.msra.mxu0 %v1436
        %1713 = vmatprep.subr.bf16.mxu0 0
        %1714 = vmatpush1.bf16.msra.mxu0 %v1437
        %1715 = vmatprep.subr.bf16.mxu0 0
        %1716 = vmatpush1.bf16.msra.mxu0 %v1438
        %1717 = vmatprep.subr.bf16.mxu0 0
        %1718 = vmatpush1.bf16.msra.mxu0 %v1439
        %1719 = vmatprep.subr.bf16.mxu0 0
        %1720 = vmatpush1.bf16.msra.mxu0 %v1440
        %1721 = vmatprep.subr.bf16.mxu0 0
        %1722 = vmatpush1.bf16.msra.mxu0 %v1441
        %1723 = vmatprep.subr.bf16.mxu0 0
        %1724 = vmatpush1.bf16.msra.mxu0 %v1442
        %1725 = vmatprep.subr.bf16.mxu0 0
        %1726 = vmatpush1.bf16.msra.mxu0 %v1443
        %1727 = vmatprep.mubr.bf16.mxu0 %v1692
        %1728 = vmatmul.mubr.bf16.gmra.mrb[0].mxu0 %v1691
        %v1729 = vpop.f32.mrb[0].mxu0
        %v1730 = vadd.f32 %v1298, %v1729
        %v1731 = vpop.f32.mrb[0].mxu0
        %v1732 = vpop.f32.mrb[0].mxu0
        %v1733 = vpop.f32.mrb[0].mxu0
        %1734 = vdwg.mxu0
        %1735 = vmatprep.subr.bf16.mxu0 0
        %1736 = vmatpush1.bf16.msra.mxu0 %v1444
        %1737 = vmatprep.subr.bf16.mxu0 0
        %1738 = vmatpush1.bf16.msra.mxu0 %v1445
        %1739 = vmatprep.subr.bf16.mxu0 0
        %1740 = vmatpush1.bf16.msra.mxu0 %v1446
        %1741 = vmatprep.subr.bf16.mxu0 0
        %1742 = vmatpush1.bf16.msra.mxu0 %v1447
        %1743 = vmatprep.subr.bf16.mxu0 0
        %1744 = vmatpush1.bf16.msra.mxu0 %v1448
        %1745 = vmatprep.subr.bf16.mxu0 0
        %1746 = vmatpush1.bf16.msra.mxu0 %v1449
        %1747 = vmatprep.subr.bf16.mxu0 0
        %1748 = vmatpush1.bf16.msra.mxu0 %v1450
        %1749 = vmatprep.subr.bf16.mxu0 0
        %1750 = vmatpush1.bf16.msra.mxu0 %v1451
        %1751 = vmatprep.subr.bf16.mxu0 0
        %1752 = vmatpush1.bf16.msra.mxu0 %v1452
        %1753 = vmatprep.subr.bf16.mxu0 0
        %1754 = vmatpush1.bf16.msra.mxu0 %v1453
        %1755 = vmatprep.subr.bf16.mxu0 0
        %1756 = vmatpush1.bf16.msra.mxu0 %v1454
        %1757 = vmatprep.subr.bf16.mxu0 0
        %1758 = vmatpush1.bf16.msra.mxu0 %v1455
        %1759 = vmatprep.subr.bf16.mxu0 0
        %1760 = vmatpush1.bf16.msra.mxu0 %v1456
        %1761 = vmatprep.subr.bf16.mxu0 0
        %1762 = vmatpush1.bf16.msra.mxu0 %v1457
        %1763 = vmatprep.subr.bf16.mxu0 0
        %1764 = vmatpush1.bf16.msra.mxu0 %v1458
        %1765 = vmatprep.subr.bf16.mxu0 0
        %1766 = vmatpush1.bf16.msra.mxu0 %v1459
        %1767 = vmatprep.mubr.bf16.mxu0 %v1694
        %1768 = vmatmul.mubr.bf16.gmra.mrb[0].mxu0 %v1693
        %v1769 = vpop.f32.mrb[0].mxu0
        %v1770 = vadd.f32 %v1730, %v1769
        %v1771 = vpop.f32.mrb[0].mxu0
        %v1772 = vpop.f32.mrb[0].mxu0
        %v1773 = vpop.f32.mrb[0].mxu0
        %1774 = vdwg.mxu0
        %v1775 = vadd.f32 %v1770, %v887
        %1776 = vst [vmem:[%s415] sm:$0xff] %v1775
        %p1777 = scmp.lt.s32.totalorder %s23, 1
        %s1778 = scalar_select %p1777, %s23, 1
        %s1779 = smul.addr %s1778, 8
        %s1780 = scalar_lea.vmem %s10, %s1779
        // Predicated region
        $region73: #{multiview_qformer_layer_forward.1} parent=59 // pred_check
          %p1781 = pneg %p261
        $region74: #{multiview_qformer_layer_forward.1} parent=59 // pred_check_branch
          %1783 = sbr.rel (%p1781) target = $region76
        $region75: #{multiview_qformer_layer_forward.1} parent=59 // pred_region
          _
        $region76: #{multiview_qformer_layer_forward.1} parent=59 // pred_fallthru
          _
      $region60: #{multiview_qformer_layer_forward.1} parent=5 // pred_fallthru
        _
      %p1784 = scmp.le.s32.totalorder 2, %s18
      // Predicated region
      $region77: #{multiview_qformer_layer_forward.1} parent=5 // pred_check
        %p1785 = pneg %p1784
      $region78: #{multiview_qformer_layer_forward.1} parent=5 // pred_check_branch
        %1787 = sbr.rel (%p1785) target = $region80
      $region79: #{multiview_qformer_layer_forward.1} parent=5 // pred_region
        %s1788 = ssub.s32 %s18, 2
        // Predicated region
        $region81: #{multiview_qformer_layer_forward.1} parent=79 // pred_check
          %p1789 = pneg %p267
        $region82: #{multiview_qformer_layer_forward.1} parent=79 // pred_check_branch
          %1791 = sbr.rel (%p1789) target = $region84
        $region83: #{multiview_qformer_layer_forward.1} parent=79 // pred_region
          %p1792 = scmp.lt.s32.totalorder %s24, 1
          %s1793 = scalar_select %p1792, %s24, 1
          %s1794 = smul.addr %s1793, 8
          %s1795 = scalar_lea.vmem %s10, %s1794
        $region84: #{multiview_qformer_layer_forward.1} parent=79 // pred_fallthru
          _
      $region80: #{multiview_qformer_layer_forward.1} parent=5 // pred_fallthru
        _
    $region6: #{multiview_qformer_layer_forward.1} parent=1 // loop_footer
      %s22 = sadd.s32 1, %s18
    $region7: #{multiview_qformer_layer_forward.1} parent=1 // loop_footer_branch
      %17 = sbr.rel target = $region3
    $region8: #{multiview_qformer_layer_forward.1} parent=1 // loop_exit
      _
    %1796 = vsyncpa [#allocation3], 1
    %s1797 = scalar_lea.sflag [#allocation3], 1
    %1798 = vsyncpa %s1797, 1
    %1799 = vsyncpa [#allocation5], 1

</llo_original>
